<compile_context>
chip_gen: v7x
topology: tpu7x:2x2x1
jax: 0.10.0
libtpu: 0.0.40
codegen_flags: <defaults>
</compile_context>

<pallas_src>
import functools

import jax
import jax.numpy as jnp
import numpy as np
from jax import lax
from jax.experimental import pallas as pl
from jax.experimental.pallas import tpu as pltpu

# ----- module hyper-parameters (MyoSkeletonEncoder.__init__ args) --------------------
NFEATS = 12
WIDTH = 32
DEPTH = 3
DOWN_T = 2
STRIDE_T = 2
DILATION_GROWTH_RATE = 2
# activation=nn.ReLU(), norm=None (module defaults for this synthetic instance)

# ----- grouped (block-banded) layout constants ---------------------------------------
G_OUT = 128 // WIDTH           # output timesteps per group -> 128 lanes (dense)
G_IN = G_OUT * STRIDE_T        # input timesteps per group  -> 256 lanes
GW = G_OUT * WIDTH             # 128
GINW = G_IN * WIDTH            # 256
assert 128 % WIDTH == 0
# 3-band structure (g-1, g, g+1) is valid only while max dilation <= G_OUT.
assert DILATION_GROWTH_RATE ** (DEPTH - 1) <= G_OUT


def _encoder_kernel(m_ref, gidx_ref, win_ref, bin_ref, w0_ref, w1_ref, w2_ref,
                    bc_ref, wout_ref, bout_ref, o_ref, in_scr, act_scr,
                    *, ng, in_tail, out_tail):
    rows = o_ref.shape[0]                       # b_tile * ng  (multiple of 8)

    # Per-row group index (same band structure for every layer).  Precomputed in
    # the wrapper to avoid an in-kernel integer modulo.
    g_idx = gidx_ref[...]                       # (rows, 1) int32, value = row % ng
    has_left = g_idx != 0
    has_right = g_idx != (ng - 1)
    is_last = g_idx == (ng - 1)

    def zero_tail(x, valid_slots):
        # Zero timestep slots >= valid_slots in the last group of every batch
        # element (padding slots must read as zeros for the next layer's taps).
        lane = lax.broadcasted_iota(jnp.int32, (1, x.shape[1]), 1)
        return jnp.where(is_last & (lane >= valid_slots * WIDTH), 0.0, x)

    # ---- input projection, grouped: (rows, 8F) @ (8F, 256), lane dense ----
    x = jnp.dot(m_ref[...].astype(jnp.bfloat16), win_ref[...],
                preferred_element_type=jnp.float32) + bin_ref[...]
    if in_tail < G_IN:            # zero-padded input timesteps picked up the bias
        x = zero_tail(x, in_tail)
    in_scr[pl.ds(1, rows), :] = x

    # ---- conv stack as block-banded matmuls: y_g = x_{g-1}@A + x_g@B + x_{g+1}@C ----
    conv_w = (w0_ref, w1_ref, w2_ref)
    src = in_scr
    for i in range(DEPTH):
        w = conv_w[i]
        xl = jnp.where(has_left, src[pl.ds(0, rows), :], 0.0).astype(jnp.bfloat16)
        xc = src[pl.ds(1, rows), :].astype(jnp.bfloat16)
        xr = jnp.where(has_right, src[pl.ds(2, rows), :], 0.0).astype(jnp.bfloat16)
        y = (jnp.dot(xl, w[0], preferred_element_type=jnp.float32) +
             jnp.dot(xc, w[1], preferred_element_type=jnp.float32) +
             jnp.dot(xr, w[2], preferred_element_type=jnp.float32))
        y = jnp.maximum(y + bc_ref[pl.ds(i, 1), :], 0.0)        # bias + ReLU in f32
        if i < DEPTH - 1:
            if out_tail < G_OUT:   # keep the zero padding seen by the next layer
                y = zero_tail(y, out_tail)
            act_scr[pl.ds(1, rows), :] = y
            src = act_scr
        else:
            # ---- output projection fused with the last conv layer (lane-dense store) ----
            o_ref[...] = (jnp.dot(y.astype(jnp.bfloat16), wout_ref[...],
                                  preferred_element_type=jnp.float32) + bout_ref[...])


def _grouped_params(params):
    """Precompute block-diagonal / block-banded weights for the grouped layout."""
    win, b_in, wc, bc, wout, b_out = params
    f32, bf16 = jnp.float32, jnp.bfloat16

    def blockdiag(w, n):
        r, c = w.shape
        m = jnp.zeros((n * r, n * c), w.dtype)
        for i in range(n):
            m = m.at[i * r:(i + 1) * r, i * c:(i + 1) * c].set(w)
        return m

    def banded(layer, dilation, stride, slots_in):
        # y[G_OUT*g + j] = sum_k x[slots_in*g + stride*j + (k-1)*dilation] @ wc[layer, k]
        bands = [jnp.zeros((slots_in * WIDTH, GW), f32) for _ in range(3)]
        for j in range(G_OUT):
            for k in range(3):
                s = stride * j + (k - 1) * dilation
                band, m = divmod(s + slots_in, slots_in)   # 0 -> g-1, 1 -> g, 2 -> g+1
                bands[band] = bands[band].at[m * WIDTH:(m + 1) * WIDTH,
                                             j * WIDTH:(j + 1) * WIDTH].add(wc[layer, k])
        return jnp.stack(bands).astype(bf16)

    win_g = blockdiag(win, G_IN).astype(bf16)                        # (8F, 256)
    bin_g = jnp.tile(b_in.reshape(1, WIDTH), (1, G_IN)).astype(f32)  # (1, 256)
    w0 = banded(0, 1, STRIDE_T, G_IN)                                # (3, 256, 128)
    w1 = banded(1, DILATION_GROWTH_RATE, 1, G_OUT)                   # (3, 128, 128)
    w2 = banded(2, DILATION_GROWTH_RATE ** 2, 1, G_OUT)              # (3, 128, 128)
    bc_g = jnp.tile(bc, (1, G_OUT)).astype(f32)                      # (DEPTH, 128)
    wout_g = blockdiag(wout, G_OUT).astype(bf16)                     # (128, 128)
    bout_g = jnp.tile(b_out.reshape(1, WIDTH), (1, G_OUT)).astype(f32)
    return win_g, bin_g, w0, w1, w2, bc_g, wout_g, bout_g


def _pick_b_tile(B, ng):
    # Per-batch-element resident VMEM: double-buffered in/out blocks + scratches.
    per_elem = ng * (2 * G_IN * NFEATS * 4 + 2 * GW * 4 + GINW * 4 + GW * 4)
    tile = max(8, min(512, (10 << 20) // max(per_elem, 1)))   # ~10 MiB budget
    if B > tile:
        # Keep >= 2 grid steps so the 'parallel' axis feeds both v7x TensorCores,
        # then rebalance to minimise batch padding waste.
        tile = min(tile, pl.cdiv(pl.cdiv(B, 2), 8) * 8)
        steps = pl.cdiv(B, tile)
        tile = pl.cdiv(pl.cdiv(B, steps), 8) * 8
    else:
        tile = pl.cdiv(B, 8) * 8
    return int(max(8, (tile // 8) * 8))


def myoskeleton_encoder_pallas(motion, params, *, b_tile=None):
    """motion: (B, T, nfeats) f32 -> (B, (T-1)//stride_t + 1, width) f32."""
    B, T, F = motion.shape
    assert F == NFEATS
    lo = (T - 1) // STRIDE_T + 1                 # conv layer-0 output length
    ng = pl.cdiv(lo, G_OUT)                      # groups of 4 out / 8 in timesteps
    T_pad = ng * G_IN
    in_tail = T - (ng - 1) * G_IN                # valid input slots in last group
    out_tail = lo - (ng - 1) * G_OUT             # valid output slots in last group

    if b_tile is None:
        b_tile = _pick_b_tile(B, ng)
    b_tile = max(8, (int(b_tile) // 8) * 8)      # sublane-aligned batch tile
    n_steps = pl.cdiv(B, b_tile)
    B_pad = n_steps * b_tile

    if B_pad != B or T_pad != T:
        motion = jnp.pad(motion, ((0, B_pad - B), (0, T_pad - T), (0, 0)))
    # Free row-major reshape: (b, 8h+m, f) -> row b*ng+h, lane m*F+f.
    m_g = motion.reshape(B_pad * ng, G_IN * F)

    win_g, bin_g, w0, w1, w2, bc_g, wout_g, bout_g = _grouped_params(params)

    rows_blk = b_tile * ng
    # Per-row group index (same for every grid step) -> avoids in-kernel modulo.
    gidx = jnp.tile(jnp.arange(ng, dtype=jnp.int32), b_tile).reshape(rows_blk, 1)

    kernel = functools.partial(_encoder_kernel, ng=ng,
                               in_tail=in_tail, out_tail=out_tail)

    flops = 2 * B_pad * ng * (G_IN * F * GINW + 3 * GINW * GW
                              + (DEPTH - 1) * 3 * GW * GW + GW * GW)
    bytes_acc = (m_g.size * 4 + B_pad * ng * GW * 4
                 + 2 * (win_g.size + w0.size + w1.size + w2.size + wout_g.size)
                 + 4 * (bin_g.size + bc_g.size + bout_g.size))

    out_flat = pl.pallas_call(
        kernel,
        out_shape=jax.ShapeDtypeStruct((B_pad * ng, GW), jnp.float32),
        grid_spec=pltpu.PrefetchScalarGridSpec(
            num_scalar_prefetch=0,
            grid=(n_steps,),
            in_specs=[
                pl.BlockSpec((rows_blk, G_IN * F), lambda g: (g, 0)),   # grouped motion
                pl.BlockSpec((rows_blk, 1), lambda g: (0, 0)),          # group index
                pl.BlockSpec((G_IN * F, GINW), lambda g: (0, 0)),       # input proj W (bf16)
                pl.BlockSpec((1, GINW), lambda g: (0, 0)),              # input proj b
                pl.BlockSpec((3, GINW, GW), lambda g: (0, 0, 0)),       # conv0 bands (bf16)
                pl.BlockSpec((3, GW, GW), lambda g: (0, 0, 0)),         # conv1 bands (bf16)
                pl.BlockSpec((3, GW, GW), lambda g: (0, 0, 0)),         # conv2 bands (bf16)
                pl.BlockSpec((DEPTH, GW), lambda g: (0, 0)),            # conv biases
                pl.BlockSpec((GW, GW), lambda g: (0, 0)),               # output proj W (bf16)
                pl.BlockSpec((1, GW), lambda g: (0, 0)),                # output proj b
            ],
            out_specs=pl.BlockSpec((rows_blk, GW), lambda g: (g, 0)),
            scratch_shapes=[pltpu.VMEM((rows_blk + 8, GINW), jnp.float32),
                            pltpu.VMEM((rows_blk + 8, GW), jnp.float32)],
        ),
        # Batch tiles are fully independent -> parallel (both TCs on v7x).
        compiler_params=pltpu.CompilerParams(
            dimension_semantics=("parallel",),
            vmem_limit_bytes=32 << 20),          # v5e scoped default is only 16 MiB
        cost_estimate=pl.CostEstimate(flops=flops, transcendentals=0,
                                      bytes_accessed=bytes_acc),
    )(m_g, gidx, win_g, bin_g, w0, w1, w2, bc_g, wout_g, bout_g)

    # Pure layout plumbing: (B_pad*ng, 128) -> (B_pad, ng*4, 32), then strip padding.
    out = out_flat.reshape(B_pad, ng * G_OUT, WIDTH)
    return out[:B, :lo]
    # TODO(synk): emitting a bf16 output (and taking bf16 motion) would halve the
    # remaining HBM traffic but changes the module's f32 output dtype, so it is
    # left to the caller.


def reference(motion, params):
    """Pure-JAX reference mirroring the PyTorch forward (Linear -> Conv1d stack -> Linear)."""
    win, b_in, wc, bc, wout, b_out = params
    x = motion @ win + b_in                        # (B, T, W)
    x = jnp.transpose(x, (0, 2, 1))                # (B, W, T)  NCL like torch
    for i in range(DEPTH):
        dil = DILATION_GROWTH_RATE ** i
        stride = STRIDE_T if i == 0 else 1
        w_torch = jnp.transpose(wc[i], (2, 1, 0))  # (C_out, C_in, K) torch conv layout
        x = lax.conv_general_dilated(
            x, w_torch, window_strides=(stride,), padding=[(dil, dil)],
            rhs_dilation=(dil,), dimension_numbers=('NCH', 'OIH', 'NCH'))
        x = x + bc[i][None, :, None]
        x = jnp.maximum(x, 0.0)
    x = jnp.transpose(x, (0, 2, 1))
    return x @ wout + b_out


def _make_params(key):
    keys = jax.random.split(key, 6)
    win = jax.random.normal(keys[0], (NFEATS, WIDTH), jnp.float32) * 0.2
    b_in = jax.random.normal(keys[1], (WIDTH,), jnp.float32) * 0.1
    wc = jax.random.normal(keys[2], (DEPTH, 3, WIDTH, WIDTH), jnp.float32) * 0.1
    bc = jax.random.normal(keys[3], (DEPTH, WIDTH), jnp.float32) * 0.1
    wout = jax.random.normal(keys[4], (WIDTH, WIDTH), jnp.float32) * 0.1
    b_out = jax.random.normal(keys[5], (WIDTH,), jnp.float32) * 0.1
    return (win, b_in, wc, bc, wout, b_out)


if __name__ == "__main__":
    key = jax.random.PRNGKey(0)
    pkey, k1, k2, k3 = jax.random.split(key, 4)
    params = _make_params(pkey)

    # Case 1: typical even T, single batch tile (auto b_tile).
    m1 = jax.random.normal(k1, (6, 64, NFEATS), jnp.float32)
    o1 = jax.block_until_ready(myoskeleton_encoder_pallas(m1, params))
    assert o1.shape == (6, 32, WIDTH), o1.shape
    np.testing.assert_allclose(np.asarray(o1), np.asarray(reference(m1, params)),
                               atol=5e-2, rtol=5e-2)

    # Case 2: tiny T (single group: every cross-group tap is conv zero-padding).
    m2 = jax.random.normal(k2, (2, 8, NFEATS), jnp.float32)
    o2 = jax.block_until_ready(myoskeleton_encoder_pallas(m2, params))
    assert o2.shape == (2, 4, WIDTH), o2.shape
    np.testing.assert_allclose(np.asarray(o2), np.asarray(reference(m2, params)),
                               atol=5e-2, rtol=5e-2)

    # Case 3: multi-step grid + batch/time padding + ragged last group (T % 8 != 0).
    m3 = jax.random.normal(k3, (20, 44, NFEATS), jnp.float32)
    o3 = jax.block_until_ready(myoskeleton_encoder_pallas(m3, params, b_tile=8))
    assert o3.shape == (20, 22, WIDTH), o3.shape
    np.testing.assert_allclose(np.asarray(o3), np.asarray(reference(m3, params)),
                               atol=5e-2, rtol=5e-2)

    print("KERNEL_OK")
</pallas_src>

<mosaic_0001>
module attributes {stable_mosaic.version = 11 : i64} {
  func.func @_encoder_kernel(%arg0: i32, %arg1: memref<64x96xf32, #tpu.memory_space<vmem>>, %arg2: memref<64x1xi32, #tpu.memory_space<vmem>>, %arg3: memref<96x256xbf16, #tpu.memory_space<vmem>>, %arg4: memref<1x256xf32, #tpu.memory_space<vmem>>, %arg5: memref<3x256x128xbf16, #tpu.memory_space<vmem>>, %arg6: memref<3x128x128xbf16, #tpu.memory_space<vmem>>, %arg7: memref<3x128x128xbf16, #tpu.memory_space<vmem>>, %arg8: memref<3x128xf32, #tpu.memory_space<vmem>>, %arg9: memref<128x128xbf16, #tpu.memory_space<vmem>>, %arg10: memref<1x128xf32, #tpu.memory_space<vmem>>, %arg11: memref<64x128xf32, #tpu.memory_space<vmem>>, %arg12: memref<72x256xf32, #tpu.memory_space<vmem>>, %arg13: memref<72x128xf32, #tpu.memory_space<vmem>>) attributes {dimension_semantics = [#tpu.dimension_semantics<parallel>], iteration_bounds = array<i64: 1>, scalar_prefetch = 0 : i64, scratch_operands = 2 : i64, tpu.core_type = #tpu.core_type<tc>, window_params = [{transform_indices = @transform_0, window_bounds = array<i64: 64, 96>}, {pipeline_mode = #tpu.pipeline_mode<synchronous>, transform_indices = @transform_1, window_bounds = array<i64: 64, 1>}, {pipeline_mode = #tpu.pipeline_mode<synchronous>, transform_indices = @transform_2, window_bounds = array<i64: 96, 256>}, {pipeline_mode = #tpu.pipeline_mode<synchronous>, transform_indices = @transform_3, window_bounds = array<i64: 1, 256>}, {pipeline_mode = #tpu.pipeline_mode<synchronous>, transform_indices = @transform_4, window_bounds = array<i64: 3, 256, 128>}, {pipeline_mode = #tpu.pipeline_mode<synchronous>, transform_indices = @transform_5, window_bounds = array<i64: 3, 128, 128>}, {pipeline_mode = #tpu.pipeline_mode<synchronous>, transform_indices = @transform_6, window_bounds = array<i64: 3, 128, 128>}, {pipeline_mode = #tpu.pipeline_mode<synchronous>, transform_indices = @transform_7, window_bounds = array<i64: 3, 128>}, {pipeline_mode = #tpu.pipeline_mode<synchronous>, transform_indices = @transform_8, window_bounds = array<i64: 128, 128>}, {pipeline_mode = #tpu.pipeline_mode<synchronous>, transform_indices = @transform_9, window_bounds = array<i64: 1, 128>}, {transform_indices = @transform_10, window_bounds = array<i64: 64, 128>}]} {
    %c0 = arith.constant 0 : index
    %c0_0 = arith.constant 0 : index
    %0 = vector.load %arg2[%c0, %c0_0] : memref<64x1xi32, #tpu.memory_space<vmem>>, vector<64x1xi32>
    %c0_i32 = arith.constant 0 : i32
    %1 = vector.broadcast %c0_i32 : i32 to vector<64x1xi32>
    %2 = arith.cmpi ne, %0, %1 : vector<64x1xi32>
    %c7_i32 = arith.constant 7 : i32
    %3 = vector.broadcast %c7_i32 : i32 to vector<64x1xi32>
    %4 = arith.cmpi ne, %0, %3 : vector<64x1xi32>
    %c0_1 = arith.constant 0 : index
    %c0_2 = arith.constant 0 : index
    %5 = vector.load %arg1[%c0_1, %c0_2] : memref<64x96xf32, #tpu.memory_space<vmem>>, vector<64x96xf32>
    %6 = arith.truncf %5 : vector<64x96xf32> to vector<64x96xbf16>
    %c0_3 = arith.constant 0 : index
    %c0_4 = arith.constant 0 : index
    %7 = vector.load %arg3[%c0_3, %c0_4] : memref<96x256xbf16, #tpu.memory_space<vmem>>, vector<96x256xbf16>
    %cst = arith.constant dense<0.000000e+00> : vector<64x256xf32>
    %8 = tpu.matmul %6, %7, %cst {dimension_numbers = #tpu.dot_dimension_numbers<[1], [0], [0], [1], [0, 0, 1, 1], [], []>} : vector<64x96xbf16>, vector<96x256xbf16>, vector<64x256xf32> -> vector<64x256xf32>
    %c0_5 = arith.constant 0 : index
    %c0_6 = arith.constant 0 : index
    %9 = vector.load %arg4[%c0_5, %c0_6] : memref<1x256xf32, #tpu.memory_space<vmem>>, vector<1x256xf32>
    %10 = vector.broadcast %9 : vector<1x256xf32> to vector<64x256xf32>
    %11 = arith.addf %8, %10 : vector<64x256xf32>
    %c1 = arith.constant 1 : index
    %c0_7 = arith.constant 0 : index
    %12 = vector.load %arg12[%c1, %c0_7] : memref<72x256xf32, #tpu.memory_space<vmem>>, vector<64x256xf32>
    tpu.vector_store %arg12[%c1, %c0_7], %11 {strides = array<i32>} : memref<72x256xf32, #tpu.memory_space<vmem>>, vector<64x256xf32>,
    %c0_8 = arith.constant 0 : index
    %c0_9 = arith.constant 0 : index
    %13 = vector.load %arg12[%c0_8, %c0_9] : memref<72x256xf32, #tpu.memory_space<vmem>>, vector<64x256xf32>
    %cst_10 = arith.constant 0.000000e+00 : f32
    %14 = vector.shape_cast %2 : vector<64x1xi1> to vector<64x1xi1>
    %15 = vector.broadcast %14 : vector<64x1xi1> to vector<64x256xi1>
    %16 = vector.broadcast %cst_10 : f32 to vector<64x256xf32>
    %17 = arith.select %15, %13, %16 : vector<64x256xi1>, vector<64x256xf32>
    %18 = arith.truncf %17 : vector<64x256xf32> to vector<64x256xbf16>
    %c1_11 = arith.constant 1 : index
    %c0_12 = arith.constant 0 : index
    %19 = vector.load %arg12[%c1_11, %c0_12] : memref<72x256xf32, #tpu.memory_space<vmem>>, vector<64x256xf32>
    %20 = arith.truncf %19 : vector<64x256xf32> to vector<64x256xbf16>
    %c2 = arith.constant 2 : index
    %c0_13 = arith.constant 0 : index
    %21 = vector.load %arg12[%c2, %c0_13] : memref<72x256xf32, #tpu.memory_space<vmem>>, vector<64x256xf32>
    %cst_14 = arith.constant 0.000000e+00 : f32
    %22 = vector.shape_cast %4 : vector<64x1xi1> to vector<64x1xi1>
    %23 = vector.broadcast %22 : vector<64x1xi1> to vector<64x256xi1>
    %24 = vector.broadcast %cst_14 : f32 to vector<64x256xf32>
    %25 = arith.select %23, %21, %24 : vector<64x256xi1>, vector<64x256xf32>
    %26 = arith.truncf %25 : vector<64x256xf32> to vector<64x256xbf16>
    %c0_15 = arith.constant 0 : index
    %c0_16 = arith.constant 0 : index
    %c0_17 = arith.constant 0 : index
    %27 = vector.load %arg5[%c0_15, %c0_16, %c0_17] : memref<3x256x128xbf16, #tpu.memory_space<vmem>>, vector<1x256x128xbf16>
    %28 = vector.shape_cast %27 : vector<1x256x128xbf16> to vector<256x128xbf16>
    %cst_18 = arith.constant dense<0.000000e+00> : vector<64x128xf32>
    %29 = tpu.matmul %18, %28, %cst_18 {dimension_numbers = #tpu.dot_dimension_numbers<[1], [0], [0], [1], [0, 0, 1, 1], [], []>} : vector<64x256xbf16>, vector<256x128xbf16>, vector<64x128xf32> -> vector<64x128xf32>
    %c1_19 = arith.constant 1 : index
    %c0_20 = arith.constant 0 : index
    %c0_21 = arith.constant 0 : index
    %30 = vector.load %arg5[%c1_19, %c0_20, %c0_21] : memref<3x256x128xbf16, #tpu.memory_space<vmem>>, vector<1x256x128xbf16>
    %31 = vector.shape_cast %30 : vector<1x256x128xbf16> to vector<256x128xbf16>
    %cst_22 = arith.constant dense<0.000000e+00> : vector<64x128xf32>
    %32 = tpu.matmul %20, %31, %cst_22 {dimension_numbers = #tpu.dot_dimension_numbers<[1], [0], [0], [1], [0, 0, 1, 1], [], []>} : vector<64x256xbf16>, vector<256x128xbf16>, vector<64x128xf32> -> vector<64x128xf32>
    %33 = arith.addf %29, %32 : vector<64x128xf32>
    %c2_23 = arith.constant 2 : index
    %c0_24 = arith.constant 0 : index
    %c0_25 = arith.constant 0 : index
    %34 = vector.load %arg5[%c2_23, %c0_24, %c0_25] : memref<3x256x128xbf16, #tpu.memory_space<vmem>>, vector<1x256x128xbf16>
    %35 = vector.shape_cast %34 : vector<1x256x128xbf16> to vector<256x128xbf16>
    %cst_26 = arith.constant dense<0.000000e+00> : vector<64x128xf32>
    %36 = tpu.matmul %26, %35, %cst_26 {dimension_numbers = #tpu.dot_dimension_numbers<[1], [0], [0], [1], [0, 0, 1, 1], [], []>} : vector<64x256xbf16>, vector<256x128xbf16>, vector<64x128xf32> -> vector<64x128xf32>
    %37 = arith.addf %33, %36 : vector<64x128xf32>
    %c0_27 = arith.constant 0 : index
    %c0_28 = arith.constant 0 : index
    %38 = vector.load %arg8[%c0_27, %c0_28] : memref<3x128xf32, #tpu.memory_space<vmem>>, vector<1x128xf32>
    %39 = vector.broadcast %38 : vector<1x128xf32> to vector<64x128xf32>
    %40 = arith.addf %37, %39 : vector<64x128xf32>
    %cst_29 = arith.constant 0.000000e+00 : f32
    %41 = vector.broadcast %cst_29 : f32 to vector<64x128xf32>
    %42 = arith.maximumf %40, %41 : vector<64x128xf32>
    %c1_30 = arith.constant 1 : index
    %c0_31 = arith.constant 0 : index
    %43 = vector.load %arg13[%c1_30, %c0_31] : memref<72x128xf32, #tpu.memory_space<vmem>>, vector<64x128xf32>
    tpu.vector_store %arg13[%c1_30, %c0_31], %42 {strides = array<i32>} : memref<72x128xf32, #tpu.memory_space<vmem>>, vector<64x128xf32>,
    %c0_32 = arith.constant 0 : index
    %c0_33 = arith.constant 0 : index
    %44 = vector.load %arg13[%c0_32, %c0_33] : memref<72x128xf32, #tpu.memory_space<vmem>>, vector<64x128xf32>
    %cst_34 = arith.constant 0.000000e+00 : f32
    %45 = vector.shape_cast %2 : vector<64x1xi1> to vector<64x1xi1>
    %46 = vector.broadcast %45 : vector<64x1xi1> to vector<64x128xi1>
    %47 = vector.broadcast %cst_34 : f32 to vector<64x128xf32>
    %48 = arith.select %46, %44, %47 : vector<64x128xi1>, vector<64x128xf32>
    %49 = arith.truncf %48 : vector<64x128xf32> to vector<64x128xbf16>
    %c1_35 = arith.constant 1 : index
    %c0_36 = arith.constant 0 : index
    %50 = vector.load %arg13[%c1_35, %c0_36] : memref<72x128xf32, #tpu.memory_space<vmem>>, vector<64x128xf32>
    %51 = arith.truncf %50 : vector<64x128xf32> to vector<64x128xbf16>
    %c2_37 = arith.constant 2 : index
    %c0_38 = arith.constant 0 : index
    %52 = vector.load %arg13[%c2_37, %c0_38] : memref<72x128xf32, #tpu.memory_space<vmem>>, vector<64x128xf32>
    %cst_39 = arith.constant 0.000000e+00 : f32
    %53 = vector.shape_cast %4 : vector<64x1xi1> to vector<64x1xi1>
    %54 = vector.broadcast %53 : vector<64x1xi1> to vector<64x128xi1>
    %55 = vector.broadcast %cst_39 : f32 to vector<64x128xf32>
    %56 = arith.select %54, %52, %55 : vector<64x128xi1>, vector<64x128xf32>
    %57 = arith.truncf %56 : vector<64x128xf32> to vector<64x128xbf16>
    %c0_40 = arith.constant 0 : index
    %c0_41 = arith.constant 0 : index
    %c0_42 = arith.constant 0 : index
    %58 = vector.load %arg6[%c0_40, %c0_41, %c0_42] : memref<3x128x128xbf16, #tpu.memory_space<vmem>>, vector<1x128x128xbf16>
    %59 = vector.shape_cast %58 : vector<1x128x128xbf16> to vector<128x128xbf16>
    %cst_43 = arith.constant dense<0.000000e+00> : vector<64x128xf32>
    %60 = tpu.matmul %49, %59, %cst_43 {dimension_numbers = #tpu.dot_dimension_numbers<[1], [0], [0], [1], [0, 0, 1, 1], [], []>} : vector<64x128xbf16>, vector<128x128xbf16>, vector<64x128xf32> -> vector<64x128xf32>
    %c1_44 = arith.constant 1 : index
    %c0_45 = arith.constant 0 : index
    %c0_46 = arith.constant 0 : index
    %61 = vector.load %arg6[%c1_44, %c0_45, %c0_46] : memref<3x128x128xbf16, #tpu.memory_space<vmem>>, vector<1x128x128xbf16>
    %62 = vector.shape_cast %61 : vector<1x128x128xbf16> to vector<128x128xbf16>
    %cst_47 = arith.constant dense<0.000000e+00> : vector<64x128xf32>
    %63 = tpu.matmul %51, %62, %cst_47 {dimension_numbers = #tpu.dot_dimension_numbers<[1], [0], [0], [1], [0, 0, 1, 1], [], []>} : vector<64x128xbf16>, vector<128x128xbf16>, vector<64x128xf32> -> vector<64x128xf32>
    %64 = arith.addf %60, %63 : vector<64x128xf32>
    %c2_48 = arith.constant 2 : index
    %c0_49 = arith.constant 0 : index
    %c0_50 = arith.constant 0 : index
    %65 = vector.load %arg6[%c2_48, %c0_49, %c0_50] : memref<3x128x128xbf16, #tpu.memory_space<vmem>>, vector<1x128x128xbf16>
    %66 = vector.shape_cast %65 : vector<1x128x128xbf16> to vector<128x128xbf16>
    %cst_51 = arith.constant dense<0.000000e+00> : vector<64x128xf32>
    %67 = tpu.matmul %57, %66, %cst_51 {dimension_numbers = #tpu.dot_dimension_numbers<[1], [0], [0], [1], [0, 0, 1, 1], [], []>} : vector<64x128xbf16>, vector<128x128xbf16>, vector<64x128xf32> -> vector<64x128xf32>
    %68 = arith.addf %64, %67 : vector<64x128xf32>
    %c1_52 = arith.constant 1 : index
    %c0_53 = arith.constant 0 : index
    %69 = vector.load %arg8[%c1_52, %c0_53] : memref<3x128xf32, #tpu.memory_space<vmem>>, vector<1x128xf32>
    %70 = vector.broadcast %69 : vector<1x128xf32> to vector<64x128xf32>
    %71 = arith.addf %68, %70 : vector<64x128xf32>
    %cst_54 = arith.constant 0.000000e+00 : f32
    %72 = vector.broadcast %cst_54 : f32 to vector<64x128xf32>
    %73 = arith.maximumf %71, %72 : vector<64x128xf32>
    %c1_55 = arith.constant 1 : index
    %c0_56 = arith.constant 0 : index
    %74 = vector.load %arg13[%c1_55, %c0_56] : memref<72x128xf32, #tpu.memory_space<vmem>>, vector<64x128xf32>
    tpu.vector_store %arg13[%c1_55, %c0_56], %73 {strides = array<i32>} : memref<72x128xf32, #tpu.memory_space<vmem>>, vector<64x128xf32>,
    %c0_57 = arith.constant 0 : index
    %c0_58 = arith.constant 0 : index
    %75 = vector.load %arg13[%c0_57, %c0_58] : memref<72x128xf32, #tpu.memory_space<vmem>>, vector<64x128xf32>
    %cst_59 = arith.constant 0.000000e+00 : f32
    %76 = vector.shape_cast %2 : vector<64x1xi1> to vector<64x1xi1>
    %77 = vector.broadcast %76 : vector<64x1xi1> to vector<64x128xi1>
    %78 = vector.broadcast %cst_59 : f32 to vector<64x128xf32>
    %79 = arith.select %77, %75, %78 : vector<64x128xi1>, vector<64x128xf32>
    %80 = arith.truncf %79 : vector<64x128xf32> to vector<64x128xbf16>
    %c1_60 = arith.constant 1 : index
    %c0_61 = arith.constant 0 : index
    %81 = vector.load %arg13[%c1_60, %c0_61] : memref<72x128xf32, #tpu.memory_space<vmem>>, vector<64x128xf32>
    %82 = arith.truncf %81 : vector<64x128xf32> to vector<64x128xbf16>
    %c2_62 = arith.constant 2 : index
    %c0_63 = arith.constant 0 : index
    %83 = vector.load %arg13[%c2_62, %c0_63] : memref<72x128xf32, #tpu.memory_space<vmem>>, vector<64x128xf32>
    %cst_64 = arith.constant 0.000000e+00 : f32
    %84 = vector.shape_cast %4 : vector<64x1xi1> to vector<64x1xi1>
    %85 = vector.broadcast %84 : vector<64x1xi1> to vector<64x128xi1>
    %86 = vector.broadcast %cst_64 : f32 to vector<64x128xf32>
    %87 = arith.select %85, %83, %86 : vector<64x128xi1>, vector<64x128xf32>
    %88 = arith.truncf %87 : vector<64x128xf32> to vector<64x128xbf16>
    %c0_65 = arith.constant 0 : index
    %c0_66 = arith.constant 0 : index
    %c0_67 = arith.constant 0 : index
    %89 = vector.load %arg7[%c0_65, %c0_66, %c0_67] : memref<3x128x128xbf16, #tpu.memory_space<vmem>>, vector<1x128x128xbf16>
    %90 = vector.shape_cast %89 : vector<1x128x128xbf16> to vector<128x128xbf16>
    %cst_68 = arith.constant dense<0.000000e+00> : vector<64x128xf32>
    %91 = tpu.matmul %80, %90, %cst_68 {dimension_numbers = #tpu.dot_dimension_numbers<[1], [0], [0], [1], [0, 0, 1, 1], [], []>} : vector<64x128xbf16>, vector<128x128xbf16>, vector<64x128xf32> -> vector<64x128xf32>
    %c1_69 = arith.constant 1 : index
    %c0_70 = arith.constant 0 : index
    %c0_71 = arith.constant 0 : index
    %92 = vector.load %arg7[%c1_69, %c0_70, %c0_71] : memref<3x128x128xbf16, #tpu.memory_space<vmem>>, vector<1x128x128xbf16>
    %93 = vector.shape_cast %92 : vector<1x128x128xbf16> to vector<128x128xbf16>
    %cst_72 = arith.constant dense<0.000000e+00> : vector<64x128xf32>
    %94 = tpu.matmul %82, %93, %cst_72 {dimension_numbers = #tpu.dot_dimension_numbers<[1], [0], [0], [1], [0, 0, 1, 1], [], []>} : vector<64x128xbf16>, vector<128x128xbf16>, vector<64x128xf32> -> vector<64x128xf32>
    %95 = arith.addf %91, %94 : vector<64x128xf32>
    %c2_73 = arith.constant 2 : index
    %c0_74 = arith.constant 0 : index
    %c0_75 = arith.constant 0 : index
    %96 = vector.load %arg7[%c2_73, %c0_74, %c0_75] : memref<3x128x128xbf16, #tpu.memory_space<vmem>>, vector<1x128x128xbf16>
    %97 = vector.shape_cast %96 : vector<1x128x128xbf16> to vector<128x128xbf16>
    %cst_76 = arith.constant dense<0.000000e+00> : vector<64x128xf32>
    %98 = tpu.matmul %88, %97, %cst_76 {dimension_numbers = #tpu.dot_dimension_numbers<[1], [0], [0], [1], [0, 0, 1, 1], [], []>} : vector<64x128xbf16>, vector<128x128xbf16>, vector<64x128xf32> -> vector<64x128xf32>
    %99 = arith.addf %95, %98 : vector<64x128xf32>
    %c2_77 = arith.constant 2 : index
    %c0_78 = arith.constant 0 : index
    %100 = vector.load %arg8[%c2_77, %c0_78] : memref<3x128xf32, #tpu.memory_space<vmem>>, vector<1x128xf32>
    %101 = vector.broadcast %100 : vector<1x128xf32> to vector<64x128xf32>
    %102 = arith.addf %99, %101 : vector<64x128xf32>
    %cst_79 = arith.constant 0.000000e+00 : f32
    %103 = vector.broadcast %cst_79 : f32 to vector<64x128xf32>
    %104 = arith.maximumf %102, %103 : vector<64x128xf32>
    %105 = arith.truncf %104 : vector<64x128xf32> to vector<64x128xbf16>
    %c0_80 = arith.constant 0 : index
    %c0_81 = arith.constant 0 : index
    %106 = vector.load %arg9[%c0_80, %c0_81] : memref<128x128xbf16, #tpu.memory_space<vmem>>, vector<128x128xbf16>
    %cst_82 = arith.constant dense<0.000000e+00> : vector<64x128xf32>
    %107 = tpu.matmul %105, %106, %cst_82 {dimension_numbers = #tpu.dot_dimension_numbers<[1], [0], [0], [1], [0, 0, 1, 1], [], []>} : vector<64x128xbf16>, vector<128x128xbf16>, vector<64x128xf32> -> vector<64x128xf32>
    %c0_83 = arith.constant 0 : index
    %c0_84 = arith.constant 0 : index
    %108 = vector.load %arg10[%c0_83, %c0_84] : memref<1x128xf32, #tpu.memory_space<vmem>>, vector<1x128xf32>
    %109 = vector.broadcast %108 : vector<1x128xf32> to vector<64x128xf32>
    %110 = arith.addf %107, %109 : vector<64x128xf32>
    %c0_85 = arith.constant 0 : index
    %c0_86 = arith.constant 0 : index
    %111 = vector.load %arg11[%c0_85, %c0_86] : memref<64x128xf32, #tpu.memory_space<vmem>>, vector<64x128xf32>
    tpu.vector_store %arg11[%c0_85, %c0_86], %110 {strides = array<i32>} : memref<64x128xf32, #tpu.memory_space<vmem>>, vector<64x128xf32>,
    return
  }
  func.func @transform_0(%arg0: i32) -> (i32, i32) {
    %c0_i32 = arith.constant 0 : i32
    %c0_i32_0 = arith.constant 0 : i32
    return %arg0, %c0_i32 : i32, i32
  }
  func.func @transform_1(%arg0: i32) -> (i32, i32) {
    %c0_i32 = arith.constant 0 : i32
    %c0_i32_0 = arith.constant 0 : i32
    %c0_i32_1 = arith.constant 0 : i32
    return %c0_i32, %c0_i32_0 : i32, i32
  }
  func.func @transform_2(%arg0: i32) -> (i32, i32) {
    %c0_i32 = arith.constant 0 : i32
    %c0_i32_0 = arith.constant 0 : i32
    %c0_i32_1 = arith.constant 0 : i32
    return %c0_i32, %c0_i32_0 : i32, i32
  }
  func.func @transform_3(%arg0: i32) -> (i32, i32) {
    %c0_i32 = arith.constant 0 : i32
    %c0_i32_0 = arith.constant 0 : i32
    %c0_i32_1 = arith.constant 0 : i32
    return %c0_i32, %c0_i32_0 : i32, i32
  }
  func.func @transform_4(%arg0: i32) -> (i32, i32, i32) {
    %c0_i32 = arith.constant 0 : i32
    %c0_i32_0 = arith.constant 0 : i32
    %c0_i32_1 = arith.constant 0 : i32
    %c0_i32_2 = arith.constant 0 : i32
    return %c0_i32, %c0_i32_0, %c0_i32_1 : i32, i32, i32
  }
  func.func @transform_5(%arg0: i32) -> (i32, i32, i32) {
    %c0_i32 = arith.constant 0 : i32
    %c0_i32_0 = arith.constant 0 : i32
    %c0_i32_1 = arith.constant 0 : i32
    %c0_i32_2 = arith.constant 0 : i32
    return %c0_i32, %c0_i32_0, %c0_i32_1 : i32, i32, i32
  }
  func.func @transform_6(%arg0: i32) -> (i32, i32, i32) {
    %c0_i32 = arith.constant 0 : i32
    %c0_i32_0 = arith.constant 0 : i32
    %c0_i32_1 = arith.constant 0 : i32
    %c0_i32_2 = arith.constant 0 : i32
    return %c0_i32, %c0_i32_0, %c0_i32_1 : i32, i32, i32
  }
  func.func @transform_7(%arg0: i32) -> (i32, i32) {
    %c0_i32 = arith.constant 0 : i32
    %c0_i32_0 = arith.constant 0 : i32
    %c0_i32_1 = arith.constant 0 : i32
    return %c0_i32, %c0_i32_0 : i32, i32
  }
  func.func @transform_8(%arg0: i32) -> (i32, i32) {
    %c0_i32 = arith.constant 0 : i32
    %c0_i32_0 = arith.constant 0 : i32
    %c0_i32_1 = arith.constant 0 : i32
    return %c0_i32, %c0_i32_0 : i32, i32
  }
  func.func @transform_9(%arg0: i32) -> (i32, i32) {
    %c0_i32 = arith.constant 0 : i32
    %c0_i32_0 = arith.constant 0 : i32
    %c0_i32_1 = arith.constant 0 : i32
    return %c0_i32, %c0_i32_0 : i32, i32
  }
  func.func @transform_10(%arg0: i32) -> (i32, i32) {
    %c0_i32 = arith.constant 0 : i32
    %c0_i32_0 = arith.constant 0 : i32
    return %arg0, %c0_i32 : i32, i32
  }
}

</mosaic_0001>

<llo_original>
// kernel: tpu_custom_call.1
$region0: #{tpu_custom_call.1}
  #allocation0 [shape = 'u32[]', space=smem, size = 0x4, offset = 0x4, fixed_abs, tag = 'smem constant byte address 0x4 - core index']
  #allocation1 [shape = 'u32[144,128]{1,0:T(1,128)}', space=vmem, size = 0x12000, scoped, tag = 'internal scratch']
  #allocation2 [shape = 'f32[72,256]{1,0:T(8,128)}', space=vmem, size = 0x12000, scoped, tag = 'scratch operand']
  #allocation3 [shape = 'f32[72,128]{1,0:T(8,128)}', space=vmem, size = 0x9000, scoped, tag = 'scratch operand']
  %s0 = inlined_call_operand.vmem [shape: f32[64,96], index: 0, kind: input, shape index: {}]
  %s1 = inlined_call_operand.vmem [shape: s32[64,1], index: 1, kind: input, shape index: {}]
  %s2 = inlined_call_operand.hbm [shape: bf16[96,256], index: 2, kind: input, shape index: {}]
  %s3 = inlined_call_operand.vmem [shape: f32[1,256], index: 3, kind: input, shape index: {}]
  %s4 = inlined_call_operand.hbm [shape: bf16[3,256,128], index: 4, kind: input, shape index: {}]
  %s5 = inlined_call_operand.hbm [shape: bf16[3,128,128], index: 5, kind: input, shape index: {}]
  %s6 = inlined_call_operand.hbm [shape: bf16[3,128,128], index: 6, kind: input, shape index: {}]
  %s7 = inlined_call_operand.vmem [shape: f32[3,128], index: 7, kind: input, shape index: {}]
  %s8 = inlined_call_operand.hbm [shape: bf16[128,128], index: 8, kind: input, shape index: {}]
  %s9 = inlined_call_operand.vmem [shape: f32[1,128], index: 9, kind: input, shape index: {}]
  %s10 = inlined_call_operand.hbm [shape: f32[64,128], index: 10, kind: output, shape index: {}]
  %s11 = sld [smem:[#allocation0]]
  $region70: #{tpu_custom_call.1} parent=0
    _
  %s13 = ssub.s32 1, %s11
  %s14 = scalar_select 0, %s13, %s11
  $region1: #{tpu_custom_call.1} parent=0
    #allocation4 [shape = 'u8[49152]{0}', space=vmem, size = 0xc000, scoped, tag = 'input window, operand 2, single buffered']
    #allocation5 [shape = 's32[1]{0}', space=sflag, size = 0x4, scoped, tag = 'scoped memory for tpu_custom_call.1']
    #allocation6 [shape = 's32[1]{0}', space=sflag, size = 0x4, scoped, tag = 'scoped memory for tpu_custom_call.1']
    #allocation7 [shape = 'u8[196608]{0}', space=vmem, size = 0x30000, scoped, tag = 'input window, operand 4, single buffered']
    #allocation8 [shape = 's32[1]{0}', space=sflag, size = 0x4, scoped, tag = 'scoped memory for tpu_custom_call.1']
    #allocation9 [shape = 'u8[98304]{0}', space=vmem, size = 0x18000, scoped, tag = 'input window, operand 5, single buffered']
    #allocation10 [shape = 'u8[98304]{0}', space=vmem, size = 0x18000, scoped, tag = 'input window, operand 6, single buffered']
    #allocation11 [shape = 's32[1]{0}', space=sflag, size = 0x4, scoped, tag = 'scoped memory for tpu_custom_call.1']
    #allocation12 [shape = 'u8[32768]{0}', space=vmem, size = 0x8000, scoped, tag = 'input window, operand 8, single buffered']
    #allocation13 [shape = 'u8[32768]{0}', space=vmem, size = 0x8000, scoped, tag = 'output window, operand 0, single buffered']
    %15 = vsyncpa [#allocation5], 0
    %16 = vsyncpa [#allocation8], 0
    %17 = vsyncpa [#allocation11], 0
    %18 = vsyncpa [#allocation6], 0
    // Predicated region
    $region2: #{tpu_custom_call.1} parent=1 // pred_check
      _
    $region3: #{tpu_custom_call.1} parent=1 // pred_check_branch
      %20 = sbr.rel (0) target = $region5
    $region4: #{tpu_custom_call.1} parent=1 // pred_region
      _
    $region5: #{tpu_custom_call.1} parent=1 // pred_fallthru
      _
    // Predicated region
    $region6: #{tpu_custom_call.1} parent=1 // pred_check
      _
    $region7: #{tpu_custom_call.1} parent=1 // pred_check_branch
      %22 = sbr.rel (0) target = $region9
    $region8: #{tpu_custom_call.1} parent=1 // pred_region
      _
    $region9: #{tpu_custom_call.1} parent=1 // pred_fallthru
      _
    // Predicated region
    $region10: #{tpu_custom_call.1} parent=1 // pred_check
      _
    $region11: #{tpu_custom_call.1} parent=1 // pred_check_branch
      %24 = sbr.rel (0) target = $region13
    $region12: #{tpu_custom_call.1} parent=1 // pred_region
      %s26 = ssub.s32 1536, 1536
      %27 = vsyncadd [#allocation5], %s26
      %s28 = sshll.u32 [#allocation4], 4
      %s29 = int_to_ptr.vmem [resolvable:$true] %s28
      %34 = dma.hbm_to_vmem [thread:$0]  %s2, 1536, %s29, [#allocation5], 128, 128, 8
    $region13: #{tpu_custom_call.1} parent=1 // pred_fallthru
      _
    // Predicated region
    $region14: #{tpu_custom_call.1} parent=1 // pred_check
      _
    $region15: #{tpu_custom_call.1} parent=1 // pred_check_branch
      %36 = sbr.rel (0) target = $region17
    $region16: #{tpu_custom_call.1} parent=1 // pred_region
      _
    $region17: #{tpu_custom_call.1} parent=1 // pred_fallthru
      _
    // Predicated region
    $region18: #{tpu_custom_call.1} parent=1 // pred_check
      _
    $region19: #{tpu_custom_call.1} parent=1 // pred_check_branch
      %38 = sbr.rel (0) target = $region21
    $region20: #{tpu_custom_call.1} parent=1 // pred_region
      %s40 = ssub.s32 6144, 6144
      %41 = vsyncadd [#allocation8], %s40
      %s42 = sshll.u32 [#allocation7], 4
      %s43 = int_to_ptr.vmem [resolvable:$true] %s42
      %48 = dma.hbm_to_vmem [thread:$0]  %s4, 6144, %s43, [#allocation8], 64, 64, 4
    $region21: #{tpu_custom_call.1} parent=1 // pred_fallthru
      _
    // Predicated region
    $region22: #{tpu_custom_call.1} parent=1 // pred_check
      _
    $region23: #{tpu_custom_call.1} parent=1 // pred_check_branch
      %50 = sbr.rel (0) target = $region25
    $region24: #{tpu_custom_call.1} parent=1 // pred_region
      %s52 = ssub.s32 3072, 3072
      %53 = vsyncadd [#allocation8], %s52
      %s54 = sshll.u32 [#allocation9], 4
      %s55 = int_to_ptr.vmem [resolvable:$true] %s54
      %60 = dma.hbm_to_vmem [thread:$0]  %s5, 3072, %s55, [#allocation8], 64, 64, 4
    $region25: #{tpu_custom_call.1} parent=1 // pred_fallthru
      _
    // Predicated region
    $region26: #{tpu_custom_call.1} parent=1 // pred_check
      _
    $region27: #{tpu_custom_call.1} parent=1 // pred_check_branch
      %62 = sbr.rel (0) target = $region29
    $region28: #{tpu_custom_call.1} parent=1 // pred_region
      %s64 = ssub.s32 3072, 3072
      %65 = vsyncadd [#allocation11], %s64
      %s66 = sshll.u32 [#allocation10], 4
      %s67 = int_to_ptr.vmem [resolvable:$true] %s66
      %72 = dma.hbm_to_vmem [thread:$0]  %s6, 3072, %s67, [#allocation11], 64, 64, 4
    $region29: #{tpu_custom_call.1} parent=1 // pred_fallthru
      _
    // Predicated region
    $region30: #{tpu_custom_call.1} parent=1 // pred_check
      _
    $region31: #{tpu_custom_call.1} parent=1 // pred_check_branch
      %74 = sbr.rel (0) target = $region33
    $region32: #{tpu_custom_call.1} parent=1 // pred_region
      _
    $region33: #{tpu_custom_call.1} parent=1 // pred_fallthru
      _
    // Predicated region
    $region34: #{tpu_custom_call.1} parent=1 // pred_check
      _
    $region35: #{tpu_custom_call.1} parent=1 // pred_check_branch
      %76 = sbr.rel (0) target = $region37
    $region36: #{tpu_custom_call.1} parent=1 // pred_region
      %s78 = ssub.s32 1024, 1024
      %79 = vsyncadd [#allocation11], %s78
      %s80 = sshll.u32 [#allocation12], 4
      %s81 = int_to_ptr.vmem [resolvable:$true] %s80
      %86 = dma.hbm_to_vmem [thread:$0]  %s8, 1024, %s81, [#allocation11], 64, 64, 4
    $region37: #{tpu_custom_call.1} parent=1 // pred_fallthru
      _
    // Predicated region
    $region38: #{tpu_custom_call.1} parent=1 // pred_check
      _
    $region39: #{tpu_custom_call.1} parent=1 // pred_check_branch
      %88 = sbr.rel (0) target = $region41
    $region40: #{tpu_custom_call.1} parent=1 // pred_region
      _
    $region41: #{tpu_custom_call.1} parent=1 // pred_fallthru
      _
    // Predicated region
    $region42: #{tpu_custom_call.1} parent=1 // pred_check
      _
    $region43: #{tpu_custom_call.1} parent=1 // pred_check_branch
      %90 = sbr.rel (0) target = $region45
    $region44: #{tpu_custom_call.1} parent=1 // pred_region
      %91 = dma.done [#allocation5], 1536
    $region45: #{tpu_custom_call.1} parent=1 // pred_fallthru
      _
    // Predicated region
    $region46: #{tpu_custom_call.1} parent=1 // pred_check
      _
    $region47: #{tpu_custom_call.1} parent=1 // pred_check_branch
      %93 = sbr.rel (0) target = $region49
    $region48: #{tpu_custom_call.1} parent=1 // pred_region
      %94 = dma.done [#allocation8], 6144
    $region49: #{tpu_custom_call.1} parent=1 // pred_fallthru
      _
    // Predicated region
    $region50: #{tpu_custom_call.1} parent=1 // pred_check
      _
    $region51: #{tpu_custom_call.1} parent=1 // pred_check_branch
      %96 = sbr.rel (0) target = $region53
    $region52: #{tpu_custom_call.1} parent=1 // pred_region
      %97 = dma.done [#allocation8], 3072
    $region53: #{tpu_custom_call.1} parent=1 // pred_fallthru
      _
    // Predicated region
    $region54: #{tpu_custom_call.1} parent=1 // pred_check
      _
    $region55: #{tpu_custom_call.1} parent=1 // pred_check_branch
      %99 = sbr.rel (0) target = $region57
    $region56: #{tpu_custom_call.1} parent=1 // pred_region
      %100 = dma.done [#allocation11], 3072
    $region57: #{tpu_custom_call.1} parent=1 // pred_fallthru
      _
    // Predicated region
    $region58: #{tpu_custom_call.1} parent=1 // pred_check
      _
    $region59: #{tpu_custom_call.1} parent=1 // pred_check_branch
      %102 = sbr.rel (0) target = $region61
    $region60: #{tpu_custom_call.1} parent=1 // pred_region
      %103 = dma.done [#allocation11], 1024
    $region61: #{tpu_custom_call.1} parent=1 // pred_fallthru
      _
    %v105 = vld [vmem:[%s1] sm:$0xff]
    %v106 = vld [vmem:[%s1 + $0x8] sm:$0xff]
    %v107 = vld [vmem:[%s1 + $0x10] sm:$0xff]
    %v108 = vld [vmem:[%s1 + $0x18] sm:$0xff]
    %v109 = vld [vmem:[%s1 + $0x20] sm:$0xff]
    %v110 = vld [vmem:[%s1 + $0x28] sm:$0xff]
    %v111 = vld [vmem:[%s1 + $0x30] sm:$0xff]
    %v112 = vld [vmem:[%s1 + $0x38] sm:$0xff]
    %vm113 = vcmp.ne.s32.totalorder %v105, 0
    %vm114 = vcmp.ne.s32.totalorder %v106, 0
    %vm115 = vcmp.ne.s32.totalorder %v107, 0
    %vm116 = vcmp.ne.s32.totalorder %v108, 0
    %vm117 = vcmp.ne.s32.totalorder %v109, 0
    %vm118 = vcmp.ne.s32.totalorder %v110, 0
    %vm119 = vcmp.ne.s32.totalorder %v111, 0
    %vm120 = vcmp.ne.s32.totalorder %v112, 0
    %vm121 = vcmp.ne.s32.totalorder %v105, 7
    %vm122 = vcmp.ne.s32.totalorder %v106, 7
    %vm123 = vcmp.ne.s32.totalorder %v107, 7
    %vm124 = vcmp.ne.s32.totalorder %v108, 7
    %vm125 = vcmp.ne.s32.totalorder %v109, 7
    %vm126 = vcmp.ne.s32.totalorder %v110, 7
    %vm127 = vcmp.ne.s32.totalorder %v111, 7
    %vm128 = vcmp.ne.s32.totalorder %v112, 7
    %v129 = vld [vmem:[%s0] sm:$0xff]
    %v130 = vld [vmem:[%s0 + $0x8] sm:$0xff]
    %v131 = vld [vmem:[%s0 + $0x10] sm:$0xff]
    %v132 = vld [vmem:[%s0 + $0x18] sm:$0xff]
    %v133 = vld [vmem:[%s0 + $0x20] sm:$0xff]
    %v134 = vld [vmem:[%s0 + $0x28] sm:$0xff]
    %v135 = vld [vmem:[%s0 + $0x30] sm:$0xff]
    %v136 = vld [vmem:[%s0 + $0x38] sm:$0xff]
    %v137 = vpack.c.bf16 %v130, %v129
    %v138 = vpack.c.bf16 %v132, %v131
    %v139 = vpack.c.bf16 %v134, %v133
    %v140 = vpack.c.bf16 %v136, %v135
    %v141 = vld [vmem:[#allocation4] sm:$0xff]
    %v142 = vld [vmem:[#allocation4 + $0x8] sm:$0xff]
    %v143 = vld [vmem:[#allocation4 + $0x10] sm:$0xff]
    %v144 = vld [vmem:[#allocation4 + $0x18] sm:$0xff]
    %v145 = vld [vmem:[#allocation4 + $0x20] sm:$0xff]
    %v146 = vld [vmem:[#allocation4 + $0x28] sm:$0xff]
    %v147 = vld [vmem:[#allocation4 + $0x30] sm:$0xff]
    %v148 = vld [vmem:[#allocation4 + $0x38] sm:$0xff]
    %v149 = vld [vmem:[#allocation4 + $0x40] sm:$0xff]
    %v150 = vld [vmem:[#allocation4 + $0x48] sm:$0xff]
    %v151 = vld [vmem:[#allocation4 + $0x50] sm:$0xff]
    %v152 = vld [vmem:[#allocation4 + $0x58] sm:$0xff]
    %v153 = vld [vmem:[%s3] sm:$0x3]
    %v155 = vlaneseq
    %v156 = vshrl.u32 %v155, 7
    %v157 = vsub.s32 0, %v156
    %v158 = vrot.slane %v153, %v157
    %v159 = vlaneseq
    %v160 = vshrl.u32 %v159, 7
    %v161 = vsub.s32 1, %v160
    %v162 = vrot.slane %v153, %v161
    %v177 = vunpack.c.l.b16 %v141
    %v178 = vunpack.c.h.b16 %v141
    %v179 = vunpack.c.l.b16 %v142
    %v180 = vunpack.c.h.b16 %v142
    %v181 = vunpack.c.l.b16 %v143
    %v182 = vunpack.c.h.b16 %v143
    %v183 = vunpack.c.l.b16 %v144
    %v184 = vunpack.c.h.b16 %v144
    %v185 = vunpack.c.l.b16 %v145
    %v186 = vunpack.c.h.b16 %v145
    %v187 = vunpack.c.l.b16 %v146
    %v188 = vunpack.c.h.b16 %v146
    %v189 = vunpack.c.l.b16 %v147
    %v190 = vunpack.c.h.b16 %v147
    %v191 = vunpack.c.l.b16 %v148
    %v192 = vunpack.c.h.b16 %v148
    %v193 = vunpack.c.l.b16 %v149
    %v194 = vunpack.c.h.b16 %v149
    %v195 = vunpack.c.l.b16 %v150
    %v196 = vunpack.c.h.b16 %v150
    %v197 = vunpack.c.l.b16 %v151
    %v198 = vunpack.c.h.b16 %v151
    %v199 = vunpack.c.l.b16 %v152
    %v200 = vunpack.c.h.b16 %v152
    %v201 = vpack.c.b16 %v179, %v177
    %v202 = vpack.c.b16 %v180, %v178
    %v203 = vpack.c.b16 %v183, %v181
    %v204 = vpack.c.b16 %v184, %v182
    %v205 = vpack.c.b16 %v187, %v185
    %v206 = vpack.c.b16 %v188, %v186
    %v207 = vpack.c.b16 %v191, %v189
    %v208 = vpack.c.b16 %v192, %v190
    %v209 = vpack.c.b16 %v195, %v193
    %v210 = vpack.c.b16 %v196, %v194
    %v211 = vpack.c.b16 %v199, %v197
    %v212 = vpack.c.b16 %v200, %v198
    %vm225 = vcmask 785408
    %v227 = vsel %vm225, %v137, 0
    %v230 = vsel %vm225, %v138, 0
    %v233 = vsel %vm225, %v139, 0
    %v236 = vsel %vm225, %v140, 0
    %238 = vmatprep.subr.bf16.mxu0 %v202
    %239 = vmatpush1.bf16.msra.mxu0 %v201
    %240 = vmatprep.subr.bf16.mxu0 %v204
    %241 = vmatpush1.bf16.msra.mxu0 %v203
    %242 = vmatprep.subr.bf16.mxu0 %v206
    %243 = vmatpush1.bf16.msra.mxu0 %v205
    %244 = vmatprep.subr.bf16.mxu0 %v208
    %245 = vmatpush1.bf16.msra.mxu0 %v207
    %246 = vmatprep.subr.bf16.mxu0 %v210
    %247 = vmatpush1.bf16.msra.mxu0 %v209
    %248 = vmatprep.subr.bf16.mxu0 %v212
    %249 = vmatpush1.bf16.msra.mxu0 %v211
    %250 = vmatprep.subr.bf16.mxu0 0
    %251 = vmatpush1.bf16.msra.mxu0 0
    %252 = vmatprep.subr.bf16.mxu0 0
    %253 = vmatpush1.bf16.msra.mxu0 0
    %254 = vmatprep.subr.bf16.mxu0 0
    %255 = vmatpush1.bf16.msra.mxu0 0
    %256 = vmatprep.subr.bf16.mxu0 0
    %257 = vmatpush1.bf16.msra.mxu0 0
    %258 = vmatprep.subr.bf16.mxu0 0
    %259 = vmatpush1.bf16.msra.mxu0 0
    %260 = vmatprep.subr.bf16.mxu0 0
    %261 = vmatpush1.bf16.msra.mxu0 0
    %262 = vmatprep.subr.bf16.mxu0 0
    %263 = vmatpush1.bf16.msra.mxu0 0
    %264 = vmatprep.subr.bf16.mxu0 0
    %265 = vmatpush1.bf16.msra.mxu0 0
    %266 = vmatprep.subr.bf16.mxu0 0
    %267 = vmatpush1.bf16.msra.mxu0 0
    %268 = vmatprep.subr.bf16.mxu0 0
    %269 = vmatpush1.bf16.msra.mxu0 0
    %270 = vmatprep.mubr.bf16.mxu0 0
    %271 = vmatmul.mubr.bf16.gmra.mrb[0].mxu0 %v227
    %v272 = vpop.f32.mrb[0].mxu0
    %v273 = vadd.f32 %v158, %v272
    %v274 = vpop.f32.mrb[0].mxu0
    %v275 = vadd.f32 %v162, %v274
    %v276 = vpop.f32.mrb[0].mxu0
    %v277 = vadd.f32 %v158, %v276
    %v278 = vpop.f32.mrb[0].mxu0
    %v279 = vadd.f32 %v162, %v278
    %280 = vmatprep.mubr.bf16.mxu0 0
    %281 = vmatmul.mubr.bf16.gmra.mrb[0].mxu0 %v230
    %v282 = vpop.f32.mrb[0].mxu0
    %v283 = vadd.f32 %v158, %v282
    %v284 = vpop.f32.mrb[0].mxu0
    %v285 = vadd.f32 %v162, %v284
    %v286 = vpop.f32.mrb[0].mxu0
    %v287 = vadd.f32 %v158, %v286
    %v288 = vpop.f32.mrb[0].mxu0
    %v289 = vadd.f32 %v162, %v288
    %290 = vmatprep.mubr.bf16.mxu0 0
    %291 = vmatmul.mubr.bf16.gmra.mrb[0].mxu0 %v233
    %v292 = vpop.f32.mrb[0].mxu0
    %v293 = vadd.f32 %v158, %v292
    %v294 = vpop.f32.mrb[0].mxu0
    %v295 = vadd.f32 %v162, %v294
    %v296 = vpop.f32.mrb[0].mxu0
    %v297 = vadd.f32 %v158, %v296
    %v298 = vpop.f32.mrb[0].mxu0
    %v299 = vadd.f32 %v162, %v298
    %300 = vmatprep.mubr.bf16.mxu0 0
    %301 = vmatmul.mubr.bf16.gmra.mrb[0].mxu0 %v236
    %v302 = vpop.f32.mrb[0].mxu0
    %v303 = vadd.f32 %v158, %v302
    %v304 = vpop.f32.mrb[0].mxu0
    %v305 = vadd.f32 %v162, %v304
    %v306 = vpop.f32.mrb[0].mxu0
    %v307 = vadd.f32 %v158, %v306
    %v308 = vpop.f32.mrb[0].mxu0
    %v309 = vadd.f32 %v162, %v308
    %310 = vdwg.mxu0
    %vm327 = vcmask 1040384
    %v328 = vrot.slane %v273, 7
    %v329 = vrot.slane %v275, 7
    %v330 = vrot.slane %v277, 7
    %v331 = vsel %vm327, %v328, %v330
    %v332 = vrot.slane %v279, 7
    %v333 = vsel %vm327, %v329, %v332
    %v334 = vrot.slane %v283, 7
    %v335 = vsel %vm327, %v330, %v334
    %v336 = vrot.slane %v285, 7
    %v337 = vsel %vm327, %v332, %v336
    %v338 = vrot.slane %v287, 7
    %v339 = vsel %vm327, %v334, %v338
    %v340 = vrot.slane %v289, 7
    %v341 = vsel %vm327, %v336, %v340
    %v342 = vrot.slane %v293, 7
    %v343 = vsel %vm327, %v338, %v342
    %v344 = vrot.slane %v295, 7
    %v345 = vsel %vm327, %v340, %v344
    %v346 = vrot.slane %v297, 7
    %v347 = vsel %vm327, %v342, %v346
    %v348 = vrot.slane %v299, 7
    %v349 = vsel %vm327, %v344, %v348
    %v350 = vrot.slane %v303, 7
    %v351 = vsel %vm327, %v346, %v350
    %v352 = vrot.slane %v305, 7
    %v353 = vsel %vm327, %v348, %v352
    %v354 = vrot.slane %v307, 7
    %v355 = vsel %vm327, %v350, %v354
    %v356 = vrot.slane %v309, 7
    %v357 = vsel %vm327, %v352, %v356
    %376 = vst [vmem:[#allocation2] sm:$0xfe] %v328
    %377 = vst [vmem:[#allocation2 + $0x8] sm:$0xfe] %v329
    %378 = vst [vmem:[#allocation2 + $0x10] sm:$0xff] %v331
    %379 = vst [vmem:[#allocation2 + $0x18] sm:$0xff] %v333
    %380 = vst [vmem:[#allocation2 + $0x20] sm:$0xff] %v335
    %381 = vst [vmem:[#allocation2 + $0x28] sm:$0xff] %v337
    %382 = vst [vmem:[#allocation2 + $0x30] sm:$0xff] %v339
    %383 = vst [vmem:[#allocation2 + $0x38] sm:$0xff] %v341
    %384 = vst [vmem:[#allocation2 + $0x40] sm:$0xff] %v343
    %385 = vst [vmem:[#allocation2 + $0x48] sm:$0xff] %v345
    %386 = vst [vmem:[#allocation2 + $0x50] sm:$0xff] %v347
    %387 = vst [vmem:[#allocation2 + $0x58] sm:$0xff] %v349
    %388 = vst [vmem:[#allocation2 + $0x60] sm:$0xff] %v351
    %389 = vst [vmem:[#allocation2 + $0x68] sm:$0xff] %v353
    %390 = vst [vmem:[#allocation2 + $0x70] sm:$0xff] %v355
    %391 = vst [vmem:[#allocation2 + $0x78] sm:$0xff] %v357
    %392 = vst [vmem:[#allocation2 + $0x80] sm:$0x1] %v354
    %393 = vst [vmem:[#allocation2 + $0x88] sm:$0x1] %v356
    %v394 = vld [vmem:[#allocation2] sm:$0xff]
    %v395 = vld [vmem:[#allocation2 + $0x8] sm:$0xff]
    %v396 = vld [vmem:[#allocation2 + $0x10] sm:$0xff]
    %v397 = vld [vmem:[#allocation2 + $0x18] sm:$0xff]
    %v398 = vld [vmem:[#allocation2 + $0x20] sm:$0xff]
    %v399 = vld [vmem:[#allocation2 + $0x28] sm:$0xff]
    %v400 = vld [vmem:[#allocation2 + $0x30] sm:$0xff]
    %v401 = vld [vmem:[#allocation2 + $0x38] sm:$0xff]
    %v402 = vld [vmem:[#allocation2 + $0x40] sm:$0xff]
    %v403 = vld [vmem:[#allocation2 + $0x48] sm:$0xff]
    %v404 = vld [vmem:[#allocation2 + $0x50] sm:$0xff]
    %v405 = vld [vmem:[#allocation2 + $0x58] sm:$0xff]
    %v406 = vld [vmem:[#allocation2 + $0x60] sm:$0xff]
    %v407 = vld [vmem:[#allocation2 + $0x68] sm:$0xff]
    %v408 = vld [vmem:[#allocation2 + $0x70] sm:$0xff]
    %v409 = vld [vmem:[#allocation2 + $0x78] sm:$0xff]
    %v410 = vsel %vm113, 1, 0
    %v411 = vsel %vm114, 1, 0
    %v412 = vsel %vm115, 1, 0
    %v413 = vsel %vm116, 1, 0
    %v414 = vsel %vm117, 1, 0
    %v415 = vsel %vm118, 1, 0
    %v416 = vsel %vm119, 1, 0
    %v417 = vsel %vm120, 1, 0
    %418 = vset.pattern.permute.xlu0 0
    %419 = vperm.xlu0 %418, %v410
    %v420 = vpop.permute.xlu0 %419
    %421 = vset.pattern.permute.xlu0 0
    %422 = vperm.xlu0 %421, %v411
    %v423 = vpop.permute.xlu0 %422
    %424 = vset.pattern.permute.xlu0 0
    %425 = vperm.xlu0 %424, %v412
    %v426 = vpop.permute.xlu0 %425
    %427 = vset.pattern.permute.xlu0 0
    %428 = vperm.xlu0 %427, %v413
    %v429 = vpop.permute.xlu0 %428
    %430 = vset.pattern.permute.xlu0 0
    %431 = vperm.xlu0 %430, %v414
    %v432 = vpop.permute.xlu0 %431
    %433 = vset.pattern.permute.xlu0 0
    %434 = vperm.xlu0 %433, %v415
    %v435 = vpop.permute.xlu0 %434
    %436 = vset.pattern.permute.xlu0 0
    %437 = vperm.xlu0 %436, %v416
    %v438 = vpop.permute.xlu0 %437
    %439 = vset.pattern.permute.xlu0 0
    %440 = vperm.xlu0 %439, %v417
    %v441 = vpop.permute.xlu0 %440
    %vm442 = vcmp.eq.s32.totalorder %v420, 1
    %vm443 = vcmp.eq.s32.totalorder %v423, 1
    %vm444 = vcmp.eq.s32.totalorder %v426, 1
    %vm445 = vcmp.eq.s32.totalorder %v429, 1
    %vm446 = vcmp.eq.s32.totalorder %v432, 1
    %vm447 = vcmp.eq.s32.totalorder %v435, 1
    %vm448 = vcmp.eq.s32.totalorder %v438, 1
    %vm449 = vcmp.eq.s32.totalorder %v441, 1
    %v450 = vsel %vm442, %v394, 0.0
    %v451 = vsel %vm442, %v395, 0.0
    %v452 = vsel %vm443, %v396, 0.0
    %v453 = vsel %vm443, %v397, 0.0
    %v454 = vsel %vm444, %v398, 0.0
    %v455 = vsel %vm444, %v399, 0.0
    %v456 = vsel %vm445, %v400, 0.0
    %v457 = vsel %vm445, %v401, 0.0
    %v458 = vsel %vm446, %v402, 0.0
    %v459 = vsel %vm446, %v403, 0.0
    %v460 = vsel %vm447, %v404, 0.0
    %v461 = vsel %vm447, %v405, 0.0
    %v462 = vsel %vm448, %v406, 0.0
    %v463 = vsel %vm448, %v407, 0.0
    %v464 = vsel %vm449, %v408, 0.0
    %v465 = vsel %vm449, %v409, 0.0
    %v466 = vpack.c.bf16 %v452, %v450
    %v467 = vpack.c.bf16 %v453, %v451
    %v468 = vpack.c.bf16 %v456, %v454
    %v469 = vpack.c.bf16 %v457, %v455
    %v470 = vpack.c.bf16 %v460, %v458
    %v471 = vpack.c.bf16 %v461, %v459
    %v472 = vpack.c.bf16 %v464, %v462
    %v473 = vpack.c.bf16 %v465, %v463
    %v474 = vld [vmem:[#allocation2] sm:$0xfe]
    %v475 = vld [vmem:[#allocation2 + $0x8] sm:$0xfe]
    %v476 = vld [vmem:[#allocation2 + $0x10] sm:$0xff]
    %v477 = vld [vmem:[#allocation2 + $0x18] sm:$0xff]
    %v478 = vld [vmem:[#allocation2 + $0x20] sm:$0xff]
    %v479 = vld [vmem:[#allocation2 + $0x28] sm:$0xff]
    %v480 = vld [vmem:[#allocation2 + $0x30] sm:$0xff]
    %v481 = vld [vmem:[#allocation2 + $0x38] sm:$0xff]
    %v482 = vld [vmem:[#allocation2 + $0x40] sm:$0xff]
    %v483 = vld [vmem:[#allocation2 + $0x48] sm:$0xff]
    %v484 = vld [vmem:[#allocation2 + $0x50] sm:$0xff]
    %v485 = vld [vmem:[#allocation2 + $0x58] sm:$0xff]
    %v486 = vld [vmem:[#allocation2 + $0x60] sm:$0xff]
    %v487 = vld [vmem:[#allocation2 + $0x68] sm:$0xff]
    %v488 = vld [vmem:[#allocation2 + $0x70] sm:$0xff]
    %v489 = vld [vmem:[#allocation2 + $0x78] sm:$0xff]
    %v490 = vld [vmem:[#allocation2 + $0x80] sm:$0x1]
    %v491 = vld [vmem:[#allocation2 + $0x88] sm:$0x1]
    %v492 = vpack.c.bf16 %v476, %v474
    %v493 = vpack.c.bf16 %v477, %v475
    %v494 = vpack.c.bf16 %v480, %v478
    %v495 = vpack.c.bf16 %v481, %v479
    %v496 = vpack.c.bf16 %v484, %v482
    %v497 = vpack.c.bf16 %v485, %v483
    %v498 = vpack.c.bf16 %v488, %v486
    %v499 = vpack.c.bf16 %v489, %v487
    %v500 = vpack.c.bf16 %v490, %v490
    %v501 = vpack.c.bf16 %v491, %v491
    %v502 = vld [vmem:[#allocation2] sm:$0xfc]
    %v503 = vld [vmem:[#allocation2 + $0x8] sm:$0xfc]
    %v504 = vld [vmem:[#allocation2 + $0x80] sm:$0x3]
    %v505 = vld [vmem:[#allocation2 + $0x88] sm:$0x3]
    %v506 = vsel %vm121, 1, 0
    %v507 = vsel %vm122, 1, 0
    %v508 = vsel %vm123, 1, 0
    %v509 = vsel %vm124, 1, 0
    %v510 = vsel %vm125, 1, 0
    %v511 = vsel %vm126, 1, 0
    %v512 = vsel %vm127, 1, 0
    %v513 = vsel %vm128, 1, 0
    %514 = vset.pattern.permute.xlu0 0
    %515 = vperm.xlu0 %514, %v506
    %v516 = vpop.permute.xlu0 %515
    %517 = vset.pattern.permute.xlu0 0
    %518 = vperm.xlu0 %517, %v507
    %v519 = vpop.permute.xlu0 %518
    %520 = vset.pattern.permute.xlu0 0
    %521 = vperm.xlu0 %520, %v508
    %v522 = vpop.permute.xlu0 %521
    %523 = vset.pattern.permute.xlu0 0
    %524 = vperm.xlu0 %523, %v509
    %v525 = vpop.permute.xlu0 %524
    %526 = vset.pattern.permute.xlu0 0
    %527 = vperm.xlu0 %526, %v510
    %v528 = vpop.permute.xlu0 %527
    %529 = vset.pattern.permute.xlu0 0
    %530 = vperm.xlu0 %529, %v511
    %v531 = vpop.permute.xlu0 %530
    %532 = vset.pattern.permute.xlu0 0
    %533 = vperm.xlu0 %532, %v512
    %v534 = vpop.permute.xlu0 %533
    %535 = vset.pattern.permute.xlu0 0
    %536 = vperm.xlu0 %535, %v513
    %v537 = vpop.permute.xlu0 %536
    %vm538 = vcmp.eq.s32.totalorder %v516, 1
    %vm539 = vcmp.eq.s32.totalorder %v519, 1
    %vm540 = vcmp.eq.s32.totalorder %v522, 1
    %vm541 = vcmp.eq.s32.totalorder %v525, 1
    %vm542 = vcmp.eq.s32.totalorder %v528, 1
    %vm543 = vcmp.eq.s32.totalorder %v531, 1
    %vm544 = vcmp.eq.s32.totalorder %v534, 1
    %vm545 = vcmp.eq.s32.totalorder %v537, 1
    %vm564 = vcmask 1045504
    %v565 = vrot.slane %v502, 2
    %v566 = vrot.slane %v476, 2
    %v567 = vsel %vm564, %v565, %v566
    %v568 = vrot.slane %v503, 2
    %v569 = vrot.slane %v477, 2
    %v570 = vsel %vm564, %v568, %v569
    %v571 = vrot.slane %v478, 2
    %v572 = vsel %vm564, %v566, %v571
    %v573 = vrot.slane %v479, 2
    %v574 = vsel %vm564, %v569, %v573
    %v575 = vrot.slane %v480, 2
    %v576 = vsel %vm564, %v571, %v575
    %v577 = vrot.slane %v481, 2
    %v578 = vsel %vm564, %v573, %v577
    %v579 = vrot.slane %v482, 2
    %v580 = vsel %vm564, %v575, %v579
    %v581 = vrot.slane %v483, 2
    %v582 = vsel %vm564, %v577, %v581
    %v583 = vrot.slane %v484, 2
    %v584 = vsel %vm564, %v579, %v583
    %v585 = vrot.slane %v485, 2
    %v586 = vsel %vm564, %v581, %v585
    %v587 = vrot.slane %v486, 2
    %v588 = vsel %vm564, %v583, %v587
    %v589 = vrot.slane %v487, 2
    %v590 = vsel %vm564, %v585, %v589
    %v591 = vrot.slane %v488, 2
    %v592 = vsel %vm564, %v587, %v591
    %v593 = vrot.slane %v489, 2
    %v594 = vsel %vm564, %v589, %v593
    %v595 = vrot.slane %v504, 2
    %v596 = vsel %vm564, %v591, %v595
    %v597 = vrot.slane %v505, 2
    %v598 = vsel %vm564, %v593, %v597
    %v615 = vsel %vm538, %v567, 0.0
    %v616 = vsel %vm538, %v570, 0.0
    %v617 = vsel %vm539, %v572, 0.0
    %v618 = vsel %vm539, %v574, 0.0
    %v619 = vsel %vm540, %v576, 0.0
    %v620 = vsel %vm540, %v578, 0.0
    %v621 = vsel %vm541, %v580, 0.0
    %v622 = vsel %vm541, %v582, 0.0
    %v623 = vsel %vm542, %v584, 0.0
    %v624 = vsel %vm542, %v586, 0.0
    %v625 = vsel %vm543, %v588, 0.0
    %v626 = vsel %vm543, %v590, 0.0
    %v627 = vsel %vm544, %v592, 0.0
    %v628 = vsel %vm544, %v594, 0.0
    %v629 = vsel %vm545, %v596, 0.0
    %v630 = vsel %vm545, %v598, 0.0
    %v631 = vpack.c.bf16 %v617, %v615
    %v632 = vpack.c.bf16 %v618, %v616
    %v633 = vpack.c.bf16 %v621, %v619
    %v634 = vpack.c.bf16 %v622, %v620
    %v635 = vpack.c.bf16 %v625, %v623
    %v636 = vpack.c.bf16 %v626, %v624
    %v637 = vpack.c.bf16 %v629, %v627
    %v638 = vpack.c.bf16 %v630, %v628
    %v639 = vld [vmem:[#allocation7] sm:$0xf]
    %v640 = vld [vmem:[#allocation7 + $0x4] sm:$0xf]
    %v641 = vld [vmem:[#allocation7 + $0x8] sm:$0xf]
    %v642 = vld [vmem:[#allocation7 + $0xc] sm:$0xf]
    %v643 = vld [vmem:[#allocation7 + $0x10] sm:$0xf]
    %v644 = vld [vmem:[#allocation7 + $0x14] sm:$0xf]
    %v645 = vld [vmem:[#allocation7 + $0x18] sm:$0xf]
    %v646 = vld [vmem:[#allocation7 + $0x1c] sm:$0xf]
    %v647 = vld [vmem:[#allocation7 + $0x20] sm:$0xf]
    %v648 = vld [vmem:[#allocation7 + $0x24] sm:$0xf]
    %v649 = vld [vmem:[#allocation7 + $0x28] sm:$0xf]
    %v650 = vld [vmem:[#allocation7 + $0x2c] sm:$0xf]
    %v651 = vld [vmem:[#allocation7 + $0x30] sm:$0xf]
    %v652 = vld [vmem:[#allocation7 + $0x34] sm:$0xf]
    %v653 = vld [vmem:[#allocation7 + $0x38] sm:$0xf]
    %v654 = vld [vmem:[#allocation7 + $0x3c] sm:$0xf]
    %v655 = vld [vmem:[#allocation7 + $0x40] sm:$0xf]
    %v656 = vld [vmem:[#allocation7 + $0x44] sm:$0xf]
    %v657 = vld [vmem:[#allocation7 + $0x48] sm:$0xf]
    %v658 = vld [vmem:[#allocation7 + $0x4c] sm:$0xf]
    %v659 = vld [vmem:[#allocation7 + $0x50] sm:$0xf]
    %v660 = vld [vmem:[#allocation7 + $0x54] sm:$0xf]
    %v661 = vld [vmem:[#allocation7 + $0x58] sm:$0xf]
    %v662 = vld [vmem:[#allocation7 + $0x5c] sm:$0xf]
    %v663 = vld [vmem:[#allocation7 + $0x60] sm:$0xf]
    %v664 = vld [vmem:[#allocation7 + $0x64] sm:$0xf]
    %v665 = vld [vmem:[#allocation7 + $0x68] sm:$0xf]
    %v666 = vld [vmem:[#allocation7 + $0x6c] sm:$0xf]
    %v667 = vld [vmem:[#allocation7 + $0x70] sm:$0xf]
    %v668 = vld [vmem:[#allocation7 + $0x74] sm:$0xf]
    %v669 = vld [vmem:[#allocation7 + $0x78] sm:$0xf]
    %v670 = vld [vmem:[#allocation7 + $0x7c] sm:$0xf]
    %s671 = scalar_lea.vmem [#allocation7], 128
    %v672 = vld [vmem:[%s671] sm:$0xf]
    %v673 = vld [vmem:[%s671 + $0x4] sm:$0xf]
    %v674 = vld [vmem:[%s671 + $0x8] sm:$0xf]
    %v675 = vld [vmem:[%s671 + $0xc] sm:$0xf]
    %v676 = vld [vmem:[%s671 + $0x10] sm:$0xf]
    %v677 = vld [vmem:[%s671 + $0x14] sm:$0xf]
    %v678 = vld [vmem:[%s671 + $0x18] sm:$0xf]
    %v679 = vld [vmem:[%s671 + $0x1c] sm:$0xf]
    %v680 = vld [vmem:[%s671 + $0x20] sm:$0xf]
    %v681 = vld [vmem:[%s671 + $0x24] sm:$0xf]
    %v682 = vld [vmem:[%s671 + $0x28] sm:$0xf]
    %v683 = vld [vmem:[%s671 + $0x2c] sm:$0xf]
    %v684 = vld [vmem:[%s671 + $0x30] sm:$0xf]
    %v685 = vld [vmem:[%s671 + $0x34] sm:$0xf]
    %v686 = vld [vmem:[%s671 + $0x38] sm:$0xf]
    %v687 = vld [vmem:[%s671 + $0x3c] sm:$0xf]
    %v688 = vld [vmem:[%s671 + $0x40] sm:$0xf]
    %v689 = vld [vmem:[%s671 + $0x44] sm:$0xf]
    %v690 = vld [vmem:[%s671 + $0x48] sm:$0xf]
    %v691 = vld [vmem:[%s671 + $0x4c] sm:$0xf]
    %v692 = vld [vmem:[%s671 + $0x50] sm:$0xf]
    %v693 = vld [vmem:[%s671 + $0x54] sm:$0xf]
    %v694 = vld [vmem:[%s671 + $0x58] sm:$0xf]
    %v695 = vld [vmem:[%s671 + $0x5c] sm:$0xf]
    %v696 = vld [vmem:[%s671 + $0x60] sm:$0xf]
    %v697 = vld [vmem:[%s671 + $0x64] sm:$0xf]
    %v698 = vld [vmem:[%s671 + $0x68] sm:$0xf]
    %v699 = vld [vmem:[%s671 + $0x6c] sm:$0xf]
    %v700 = vld [vmem:[%s671 + $0x70] sm:$0xf]
    %v701 = vld [vmem:[%s671 + $0x74] sm:$0xf]
    %v702 = vld [vmem:[%s671 + $0x78] sm:$0xf]
    %v703 = vld [vmem:[%s671 + $0x7c] sm:$0xf]
    %vm704 = vsmask.f32 7424
    %v706 = vshrl.u32 %v492, 16
    %v708 = vshll.u32 %v492, 16
    %v710 = vrot.slane %v708, 1
    %v711 = vor.u32 %v706, %v710
    %v713 = vshll.u32 %v494, 16
    %v715 = vrot.slane %v713, 1
    %v716 = vsel %vm704, %v711, %v715
    %v718 = vshrl.u32 %v493, 16
    %v720 = vshll.u32 %v493, 16
    %v722 = vrot.slane %v720, 1
    %v723 = vor.u32 %v718, %v722
    %v725 = vshll.u32 %v495, 16
    %v727 = vrot.slane %v725, 1
    %v728 = vsel %vm704, %v723, %v727
    %v729 = vshrl.u32 %v494, 16
    %v731 = vor.u32 %v729, %v715
    %v733 = vshll.u32 %v496, 16
    %v735 = vrot.slane %v733, 1
    %v736 = vsel %vm704, %v731, %v735
    %v737 = vshrl.u32 %v495, 16
    %v739 = vor.u32 %v737, %v727
    %v741 = vshll.u32 %v497, 16
    %v743 = vrot.slane %v741, 1
    %v744 = vsel %vm704, %v739, %v743
    %v745 = vshrl.u32 %v496, 16
    %v747 = vor.u32 %v745, %v735
    %v749 = vshll.u32 %v498, 16
    %v751 = vrot.slane %v749, 1
    %v752 = vsel %vm704, %v747, %v751
    %v753 = vshrl.u32 %v497, 16
    %v755 = vor.u32 %v753, %v743
    %v757 = vshll.u32 %v499, 16
    %v759 = vrot.slane %v757, 1
    %v760 = vsel %vm704, %v755, %v759
    %v761 = vshrl.u32 %v498, 16
    %v763 = vor.u32 %v761, %v751
    %v765 = vshll.u32 %v500, 16
    %v767 = vrot.slane %v765, 1
    %v768 = vsel %vm704, %v763, %v767
    %v769 = vshrl.u32 %v499, 16
    %v771 = vor.u32 %v769, %v759
    %v773 = vshll.u32 %v501, 16
    %v775 = vrot.slane %v773, 1
    %v776 = vsel %vm704, %v771, %v775
    %v817 = vunpack.c.l.b16 %v672
    %v818 = vunpack.c.l.b16 %v673
    %v819 = vunpack.c.l.b16 %v674
    %v820 = vunpack.c.l.b16 %v675
    %v821 = vunpack.c.l.b16 %v676
    %v822 = vunpack.c.l.b16 %v677
    %v823 = vunpack.c.l.b16 %v678
    %v824 = vunpack.c.l.b16 %v679
    %v825 = vunpack.c.l.b16 %v680
    %v826 = vunpack.c.l.b16 %v681
    %v827 = vunpack.c.l.b16 %v682
    %v828 = vunpack.c.l.b16 %v683
    %v829 = vunpack.c.l.b16 %v684
    %v830 = vunpack.c.l.b16 %v685
    %v831 = vunpack.c.l.b16 %v686
    %v832 = vunpack.c.l.b16 %v687
    %v833 = vunpack.c.l.b16 %v688
    %v834 = vunpack.c.l.b16 %v689
    %v835 = vunpack.c.l.b16 %v690
    %v836 = vunpack.c.l.b16 %v691
    %v837 = vunpack.c.l.b16 %v692
    %v838 = vunpack.c.l.b16 %v693
    %v839 = vunpack.c.l.b16 %v694
    %v840 = vunpack.c.l.b16 %v695
    %v841 = vunpack.c.l.b16 %v696
    %v842 = vunpack.c.l.b16 %v697
    %v843 = vunpack.c.l.b16 %v698
    %v844 = vunpack.c.l.b16 %v699
    %v845 = vunpack.c.l.b16 %v700
    %v846 = vunpack.c.l.b16 %v701
    %v847 = vunpack.c.l.b16 %v702
    %v848 = vunpack.c.l.b16 %v703
    %v849 = vpack.c.b16 %v818, %v817
    %v850 = vpack.c.b16 %v820, %v819
    %v851 = vpack.c.b16 %v822, %v821
    %v852 = vpack.c.b16 %v824, %v823
    %v853 = vpack.c.b16 %v826, %v825
    %v854 = vpack.c.b16 %v828, %v827
    %v855 = vpack.c.b16 %v830, %v829
    %v856 = vpack.c.b16 %v832, %v831
    %v857 = vpack.c.b16 %v834, %v833
    %v858 = vpack.c.b16 %v836, %v835
    %v859 = vpack.c.b16 %v838, %v837
    %v860 = vpack.c.b16 %v840, %v839
    %v861 = vpack.c.b16 %v842, %v841
    %v862 = vpack.c.b16 %v844, %v843
    %v863 = vpack.c.b16 %v846, %v845
    %v864 = vpack.c.b16 %v848, %v847
    %881 = vmatprep.subr.bf16.mxu0 0
    %882 = vmatpush1.bf16.msra.mxu0 %v849
    %883 = vmatprep.subr.bf16.mxu0 0
    %884 = vmatpush1.bf16.msra.mxu0 %v850
    %885 = vmatprep.subr.bf16.mxu0 0
    %886 = vmatpush1.bf16.msra.mxu0 %v851
    %887 = vmatprep.subr.bf16.mxu0 0
    %888 = vmatpush1.bf16.msra.mxu0 %v852
    %889 = vmatprep.subr.bf16.mxu0 0
    %890 = vmatpush1.bf16.msra.mxu0 %v853
    %891 = vmatprep.subr.bf16.mxu0 0
    %892 = vmatpush1.bf16.msra.mxu0 %v854
    %893 = vmatprep.subr.bf16.mxu0 0
    %894 = vmatpush1.bf16.msra.mxu0 %v855
    %895 = vmatprep.subr.bf16.mxu0 0
    %896 = vmatpush1.bf16.msra.mxu0 %v856
    %897 = vmatprep.subr.bf16.mxu0 0
    %898 = vmatpush1.bf16.msra.mxu0 %v857
    %899 = vmatprep.subr.bf16.mxu0 0
    %900 = vmatpush1.bf16.msra.mxu0 %v858
    %901 = vmatprep.subr.bf16.mxu0 0
    %902 = vmatpush1.bf16.msra.mxu0 %v859
    %903 = vmatprep.subr.bf16.mxu0 0
    %904 = vmatpush1.bf16.msra.mxu0 %v860
    %905 = vmatprep.subr.bf16.mxu0 0
    %906 = vmatpush1.bf16.msra.mxu0 %v861
    %907 = vmatprep.subr.bf16.mxu0 0
    %908 = vmatpush1.bf16.msra.mxu0 %v862
    %909 = vmatprep.subr.bf16.mxu0 0
    %910 = vmatpush1.bf16.msra.mxu0 %v863
    %911 = vmatprep.subr.bf16.mxu0 0
    %912 = vmatpush1.bf16.msra.mxu0 %v864
    %913 = vmatprep.mubr.bf16.mxu0 %v728
    %914 = vmatmul.mubr.bf16.gmra.mrb[0].mxu0 %v716
    %v915 = vpop.f32.mrb[0].mxu0
    %v916 = vadd.f32 0.0, %v915
    %v917 = vpop.f32.mrb[0].mxu0
    %v918 = vpop.f32.mrb[0].mxu0
    %v919 = vadd.f32 0.0, %v918
    %v920 = vpop.f32.mrb[0].mxu0
    %921 = vmatprep.mubr.bf16.mxu0 %v744
    %922 = vmatmul.mubr.bf16.gmra.mrb[0].mxu0 %v736
    %v923 = vpop.f32.mrb[0].mxu0
    %v924 = vadd.f32 0.0, %v923
    %v925 = vpop.f32.mrb[0].mxu0
    %v926 = vpop.f32.mrb[0].mxu0
    %v927 = vadd.f32 0.0, %v926
    %v928 = vpop.f32.mrb[0].mxu0
    %929 = vmatprep.mubr.bf16.mxu0 %v760
    %930 = vmatmul.mubr.bf16.gmra.mrb[0].mxu0 %v752
    %v931 = vpop.f32.mrb[0].mxu0
    %v932 = vadd.f32 0.0, %v931
    %v933 = vpop.f32.mrb[0].mxu0
    %v934 = vpop.f32.mrb[0].mxu0
    %v935 = vadd.f32 0.0, %v934
    %v936 = vpop.f32.mrb[0].mxu0
    %937 = vmatprep.mubr.bf16.mxu0 %v776
    %938 = vmatmul.mubr.bf16.gmra.mrb[0].mxu0 %v768
    %v939 = vpop.f32.mrb[0].mxu0
    %v940 = vadd.f32 0.0, %v939
    %v941 = vpop.f32.mrb[0].mxu0
    %v942 = vpop.f32.mrb[0].mxu0
    %v943 = vadd.f32 0.0, %v942
    %v944 = vpop.f32.mrb[0].mxu0
    %945 = vdwg.mxu0
    %v978 = vunpack.c.l.b16 %v639
    %v979 = vunpack.c.l.b16 %v640
    %v980 = vunpack.c.l.b16 %v641
    %v981 = vunpack.c.l.b16 %v642
    %v982 = vunpack.c.l.b16 %v643
    %v983 = vunpack.c.l.b16 %v644
    %v984 = vunpack.c.l.b16 %v645
    %v985 = vunpack.c.l.b16 %v646
    %v986 = vunpack.c.l.b16 %v647
    %v987 = vunpack.c.l.b16 %v648
    %v988 = vunpack.c.l.b16 %v649
    %v989 = vunpack.c.l.b16 %v650
    %v990 = vunpack.c.l.b16 %v651
    %v991 = vunpack.c.l.b16 %v652
    %v992 = vunpack.c.l.b16 %v653
    %v993 = vunpack.c.l.b16 %v654
    %v994 = vunpack.c.l.b16 %v655
    %v995 = vunpack.c.l.b16 %v656
    %v996 = vunpack.c.l.b16 %v657
    %v997 = vunpack.c.l.b16 %v658
    %v998 = vunpack.c.l.b16 %v659
    %v999 = vunpack.c.l.b16 %v660
    %v1000 = vunpack.c.l.b16 %v661
    %v1001 = vunpack.c.l.b16 %v662
    %v1002 = vunpack.c.l.b16 %v663
    %v1003 = vunpack.c.l.b16 %v664
    %v1004 = vunpack.c.l.b16 %v665
    %v1005 = vunpack.c.l.b16 %v666
    %v1006 = vunpack.c.l.b16 %v667
    %v1007 = vunpack.c.l.b16 %v668
    %v1008 = vunpack.c.l.b16 %v669
    %v1009 = vunpack.c.l.b16 %v670
    %v1010 = vpack.c.b16 %v979, %v978
    %v1011 = vpack.c.b16 %v981, %v980
    %v1012 = vpack.c.b16 %v983, %v982
    %v1013 = vpack.c.b16 %v985, %v984
    %v1014 = vpack.c.b16 %v987, %v986
    %v1015 = vpack.c.b16 %v989, %v988
    %v1016 = vpack.c.b16 %v991, %v990
    %v1017 = vpack.c.b16 %v993, %v992
    %v1018 = vpack.c.b16 %v995, %v994
    %v1019 = vpack.c.b16 %v997, %v996
    %v1020 = vpack.c.b16 %v999, %v998
    %v1021 = vpack.c.b16 %v1001, %v1000
    %v1022 = vpack.c.b16 %v1003, %v1002
    %v1023 = vpack.c.b16 %v1005, %v1004
    %v1024 = vpack.c.b16 %v1007, %v1006
    %v1025 = vpack.c.b16 %v1009, %v1008
    %1042 = vmatprep.subr.bf16.mxu0 0
    %1043 = vmatpush1.bf16.msra.mxu0 %v1010
    %1044 = vmatprep.subr.bf16.mxu0 0
    %1045 = vmatpush1.bf16.msra.mxu0 %v1011
    %1046 = vmatprep.subr.bf16.mxu0 0
    %1047 = vmatpush1.bf16.msra.mxu0 %v1012
    %1048 = vmatprep.subr.bf16.mxu0 0
    %1049 = vmatpush1.bf16.msra.mxu0 %v1013
    %1050 = vmatprep.subr.bf16.mxu0 0
    %1051 = vmatpush1.bf16.msra.mxu0 %v1014
    %1052 = vmatprep.subr.bf16.mxu0 0
    %1053 = vmatpush1.bf16.msra.mxu0 %v1015
    %1054 = vmatprep.subr.bf16.mxu0 0
    %1055 = vmatpush1.bf16.msra.mxu0 %v1016
    %1056 = vmatprep.subr.bf16.mxu0 0
    %1057 = vmatpush1.bf16.msra.mxu0 %v1017
    %1058 = vmatprep.subr.bf16.mxu0 0
    %1059 = vmatpush1.bf16.msra.mxu0 %v1018
    %1060 = vmatprep.subr.bf16.mxu0 0
    %1061 = vmatpush1.bf16.msra.mxu0 %v1019
    %1062 = vmatprep.subr.bf16.mxu0 0
    %1063 = vmatpush1.bf16.msra.mxu0 %v1020
    %1064 = vmatprep.subr.bf16.mxu0 0
    %1065 = vmatpush1.bf16.msra.mxu0 %v1021
    %1066 = vmatprep.subr.bf16.mxu0 0
    %1067 = vmatpush1.bf16.msra.mxu0 %v1022
    %1068 = vmatprep.subr.bf16.mxu0 0
    %1069 = vmatpush1.bf16.msra.mxu0 %v1023
    %1070 = vmatprep.subr.bf16.mxu0 0
    %1071 = vmatpush1.bf16.msra.mxu0 %v1024
    %1072 = vmatprep.subr.bf16.mxu0 0
    %1073 = vmatpush1.bf16.msra.mxu0 %v1025
    %1074 = vmatprep.mubr.bf16.mxu0 %v467
    %1075 = vmatmul.mubr.bf16.gmra.mrb[0].mxu0 %v466
    %v1076 = vpop.f32.mrb[0].mxu0
    %v1077 = vadd.f32 %v916, %v1076
    %v1078 = vpop.f32.mrb[0].mxu0
    %v1079 = vpop.f32.mrb[0].mxu0
    %v1080 = vadd.f32 %v919, %v1079
    %v1081 = vpop.f32.mrb[0].mxu0
    %1082 = vmatprep.mubr.bf16.mxu0 %v469
    %1083 = vmatmul.mubr.bf16.gmra.mrb[0].mxu0 %v468
    %v1084 = vpop.f32.mrb[0].mxu0
    %v1085 = vadd.f32 %v924, %v1084
    %v1086 = vpop.f32.mrb[0].mxu0
    %v1087 = vpop.f32.mrb[0].mxu0
    %v1088 = vadd.f32 %v927, %v1087
    %v1089 = vpop.f32.mrb[0].mxu0
    %1090 = vmatprep.mubr.bf16.mxu0 %v471
    %1091 = vmatmul.mubr.bf16.gmra.mrb[0].mxu0 %v470
    %v1092 = vpop.f32.mrb[0].mxu0
    %v1093 = vadd.f32 %v932, %v1092
    %v1094 = vpop.f32.mrb[0].mxu0
    %v1095 = vpop.f32.mrb[0].mxu0
    %v1096 = vadd.f32 %v935, %v1095
    %v1097 = vpop.f32.mrb[0].mxu0
    %1098 = vmatprep.mubr.bf16.mxu0 %v473
    %1099 = vmatmul.mubr.bf16.gmra.mrb[0].mxu0 %v472
    %v1100 = vpop.f32.mrb[0].mxu0
    %v1101 = vadd.f32 %v940, %v1100
    %v1102 = vpop.f32.mrb[0].mxu0
    %v1103 = vpop.f32.mrb[0].mxu0
    %v1104 = vadd.f32 %v943, %v1103
    %v1105 = vpop.f32.mrb[0].mxu0
    %1106 = vdwg.mxu0
    %s1107 = scalar_lea.vmem [#allocation7], 256
    %v1108 = vld [vmem:[%s1107] sm:$0xf]
    %v1109 = vld [vmem:[%s1107 + $0x4] sm:$0xf]
    %v1110 = vld [vmem:[%s1107 + $0x8] sm:$0xf]
    %v1111 = vld [vmem:[%s1107 + $0xc] sm:$0xf]
    %v1112 = vld [vmem:[%s1107 + $0x10] sm:$0xf]
    %v1113 = vld [vmem:[%s1107 + $0x14] sm:$0xf]
    %v1114 = vld [vmem:[%s1107 + $0x18] sm:$0xf]
    %v1115 = vld [vmem:[%s1107 + $0x1c] sm:$0xf]
    %v1116 = vld [vmem:[%s1107 + $0x20] sm:$0xf]
    %v1117 = vld [vmem:[%s1107 + $0x24] sm:$0xf]
    %v1118 = vld [vmem:[%s1107 + $0x28] sm:$0xf]
    %v1119 = vld [vmem:[%s1107 + $0x2c] sm:$0xf]
    %v1120 = vld [vmem:[%s1107 + $0x30] sm:$0xf]
    %v1121 = vld [vmem:[%s1107 + $0x34] sm:$0xf]
    %v1122 = vld [vmem:[%s1107 + $0x38] sm:$0xf]
    %v1123 = vld [vmem:[%s1107 + $0x3c] sm:$0xf]
    %v1124 = vld [vmem:[%s1107 + $0x40] sm:$0xf]
    %v1125 = vld [vmem:[%s1107 + $0x44] sm:$0xf]
    %v1126 = vld [vmem:[%s1107 + $0x48] sm:$0xf]
    %v1127 = vld [vmem:[%s1107 + $0x4c] sm:$0xf]
    %v1128 = vld [vmem:[%s1107 + $0x50] sm:$0xf]
    %v1129 = vld [vmem:[%s1107 + $0x54] sm:$0xf]
    %v1130 = vld [vmem:[%s1107 + $0x58] sm:$0xf]
    %v1131 = vld [vmem:[%s1107 + $0x5c] sm:$0xf]
    %v1132 = vld [vmem:[%s1107 + $0x60] sm:$0xf]
    %v1133 = vld [vmem:[%s1107 + $0x64] sm:$0xf]
    %v1134 = vld [vmem:[%s1107 + $0x68] sm:$0xf]
    %v1135 = vld [vmem:[%s1107 + $0x6c] sm:$0xf]
    %v1136 = vld [vmem:[%s1107 + $0x70] sm:$0xf]
    %v1137 = vld [vmem:[%s1107 + $0x74] sm:$0xf]
    %v1138 = vld [vmem:[%s1107 + $0x78] sm:$0xf]
    %v1139 = vld [vmem:[%s1107 + $0x7c] sm:$0xf]
    %v1172 = vunpack.c.l.b16 %v1108
    %v1173 = vunpack.c.l.b16 %v1109
    %v1174 = vunpack.c.l.b16 %v1110
    %v1175 = vunpack.c.l.b16 %v1111
    %v1176 = vunpack.c.l.b16 %v1112
    %v1177 = vunpack.c.l.b16 %v1113
    %v1178 = vunpack.c.l.b16 %v1114
    %v1179 = vunpack.c.l.b16 %v1115
    %v1180 = vunpack.c.l.b16 %v1116
    %v1181 = vunpack.c.l.b16 %v1117
    %v1182 = vunpack.c.l.b16 %v1118
    %v1183 = vunpack.c.l.b16 %v1119
    %v1184 = vunpack.c.l.b16 %v1120
    %v1185 = vunpack.c.l.b16 %v1121
    %v1186 = vunpack.c.l.b16 %v1122
    %v1187 = vunpack.c.l.b16 %v1123
    %v1188 = vunpack.c.l.b16 %v1124
    %v1189 = vunpack.c.l.b16 %v1125
    %v1190 = vunpack.c.l.b16 %v1126
    %v1191 = vunpack.c.l.b16 %v1127
    %v1192 = vunpack.c.l.b16 %v1128
    %v1193 = vunpack.c.l.b16 %v1129
    %v1194 = vunpack.c.l.b16 %v1130
    %v1195 = vunpack.c.l.b16 %v1131
    %v1196 = vunpack.c.l.b16 %v1132
    %v1197 = vunpack.c.l.b16 %v1133
    %v1198 = vunpack.c.l.b16 %v1134
    %v1199 = vunpack.c.l.b16 %v1135
    %v1200 = vunpack.c.l.b16 %v1136
    %v1201 = vunpack.c.l.b16 %v1137
    %v1202 = vunpack.c.l.b16 %v1138
    %v1203 = vunpack.c.l.b16 %v1139
    %v1204 = vpack.c.b16 %v1173, %v1172
    %v1205 = vpack.c.b16 %v1175, %v1174
    %v1206 = vpack.c.b16 %v1177, %v1176
    %v1207 = vpack.c.b16 %v1179, %v1178
    %v1208 = vpack.c.b16 %v1181, %v1180
    %v1209 = vpack.c.b16 %v1183, %v1182
    %v1210 = vpack.c.b16 %v1185, %v1184
    %v1211 = vpack.c.b16 %v1187, %v1186
    %v1212 = vpack.c.b16 %v1189, %v1188
    %v1213 = vpack.c.b16 %v1191, %v1190
    %v1214 = vpack.c.b16 %v1193, %v1192
    %v1215 = vpack.c.b16 %v1195, %v1194
    %v1216 = vpack.c.b16 %v1197, %v1196
    %v1217 = vpack.c.b16 %v1199, %v1198
    %v1218 = vpack.c.b16 %v1201, %v1200
    %v1219 = vpack.c.b16 %v1203, %v1202
    %1236 = vmatprep.subr.bf16.mxu0 0
    %1237 = vmatpush1.bf16.msra.mxu0 %v1204
    %1238 = vmatprep.subr.bf16.mxu0 0
    %1239 = vmatpush1.bf16.msra.mxu0 %v1205
    %1240 = vmatprep.subr.bf16.mxu0 0
    %1241 = vmatpush1.bf16.msra.mxu0 %v1206
    %1242 = vmatprep.subr.bf16.mxu0 0
    %1243 = vmatpush1.bf16.msra.mxu0 %v1207
    %1244 = vmatprep.subr.bf16.mxu0 0
    %1245 = vmatpush1.bf16.msra.mxu0 %v1208
    %1246 = vmatprep.subr.bf16.mxu0 0
    %1247 = vmatpush1.bf16.msra.mxu0 %v1209
    %1248 = vmatprep.subr.bf16.mxu0 0
    %1249 = vmatpush1.bf16.msra.mxu0 %v1210
    %1250 = vmatprep.subr.bf16.mxu0 0
    %1251 = vmatpush1.bf16.msra.mxu0 %v1211
    %1252 = vmatprep.subr.bf16.mxu0 0
    %1253 = vmatpush1.bf16.msra.mxu0 %v1212
    %1254 = vmatprep.subr.bf16.mxu0 0
    %1255 = vmatpush1.bf16.msra.mxu0 %v1213
    %1256 = vmatprep.subr.bf16.mxu0 0
    %1257 = vmatpush1.bf16.msra.mxu0 %v1214
    %1258 = vmatprep.subr.bf16.mxu0 0
    %1259 = vmatpush1.bf16.msra.mxu0 %v1215
    %1260 = vmatprep.subr.bf16.mxu0 0
    %1261 = vmatpush1.bf16.msra.mxu0 %v1216
    %1262 = vmatprep.subr.bf16.mxu0 0
    %1263 = vmatpush1.bf16.msra.mxu0 %v1217
    %1264 = vmatprep.subr.bf16.mxu0 0
    %1265 = vmatpush1.bf16.msra.mxu0 %v1218
    %1266 = vmatprep.subr.bf16.mxu0 0
    %1267 = vmatpush1.bf16.msra.mxu0 %v1219
    %1268 = vmatprep.mubr.bf16.mxu0 %v632
    %1269 = vmatmul.mubr.bf16.gmra.mrb[0].mxu0 %v631
    %v1270 = vpop.f32.mrb[0].mxu0
    %v1271 = vadd.f32 0.0, %v1270
    %v1272 = vpop.f32.mrb[0].mxu0
    %v1273 = vpop.f32.mrb[0].mxu0
    %v1274 = vadd.f32 0.0, %v1273
    %v1275 = vpop.f32.mrb[0].mxu0
    %1276 = vmatprep.mubr.bf16.mxu0 %v634
    %1277 = vmatmul.mubr.bf16.gmra.mrb[0].mxu0 %v633
    %v1278 = vpop.f32.mrb[0].mxu0
    %v1279 = vadd.f32 0.0, %v1278
    %v1280 = vpop.f32.mrb[0].mxu0
    %v1281 = vpop.f32.mrb[0].mxu0
    %v1282 = vadd.f32 0.0, %v1281
    %v1283 = vpop.f32.mrb[0].mxu0
    %1284 = vmatprep.mubr.bf16.mxu0 %v636
    %1285 = vmatmul.mubr.bf16.gmra.mrb[0].mxu0 %v635
    %v1286 = vpop.f32.mrb[0].mxu0
    %v1287 = vadd.f32 0.0, %v1286
    %v1288 = vpop.f32.mrb[0].mxu0
    %v1289 = vpop.f32.mrb[0].mxu0
    %v1290 = vadd.f32 0.0, %v1289
    %v1291 = vpop.f32.mrb[0].mxu0
    %1292 = vmatprep.mubr.bf16.mxu0 %v638
    %1293 = vmatmul.mubr.bf16.gmra.mrb[0].mxu0 %v637
    %v1294 = vpop.f32.mrb[0].mxu0
    %v1295 = vadd.f32 0.0, %v1294
    %v1296 = vpop.f32.mrb[0].mxu0
    %v1297 = vpop.f32.mrb[0].mxu0
    %v1298 = vadd.f32 0.0, %v1297
    %v1299 = vpop.f32.mrb[0].mxu0
    %1300 = vdwg.mxu0
    %v1301 = vadd.f32 %v1077, %v1271
    %v1302 = vadd.f32 %v1080, %v1274
    %v1303 = vadd.f32 %v1085, %v1279
    %v1304 = vadd.f32 %v1088, %v1282
    %v1305 = vadd.f32 %v1093, %v1287
    %v1306 = vadd.f32 %v1096, %v1290
    %v1307 = vadd.f32 %v1101, %v1295
    %v1308 = vadd.f32 %v1104, %v1298
    %v1309 = vld [vmem:[%s7] sm:$0x1]
    %v1310 = vlaneseq
    %v1311 = vshrl.u32 %v1310, 7
    %v1312 = vsub.s32 0, %v1311
    %v1313 = vrot.slane %v1309, %v1312
    %v1314 = vadd.f32 %v1301, %v1313
    %v1315 = vadd.f32 %v1302, %v1313
    %v1316 = vadd.f32 %v1303, %v1313
    %v1317 = vadd.f32 %v1304, %v1313
    %v1318 = vadd.f32 %v1305, %v1313
    %v1319 = vadd.f32 %v1306, %v1313
    %v1320 = vadd.f32 %v1307, %v1313
    %v1321 = vadd.f32 %v1308, %v1313
    %v1322 = vmax.f32 %v1314, 0.0
    %v1323 = vmax.f32 %v1315, 0.0
    %v1324 = vmax.f32 %v1316, 0.0
    %v1325 = vmax.f32 %v1317, 0.0
    %v1326 = vmax.f32 %v1318, 0.0
    %v1327 = vmax.f32 %v1319, 0.0
    %v1328 = vmax.f32 %v1320, 0.0
    %v1329 = vmax.f32 %v1321, 0.0
    %1330 = vst [vmem:[#allocation3 + $0x1] sm:$0xff] %v1322
    %1331 = vst [vmem:[#allocation3 + $0x9] sm:$0xff] %v1323
    %1332 = vst [vmem:[#allocation3 + $0x11] sm:$0xff] %v1324
    %1333 = vst [vmem:[#allocation3 + $0x19] sm:$0xff] %v1325
    %1334 = vst [vmem:[#allocation3 + $0x21] sm:$0xff] %v1326
    %1335 = vst [vmem:[#allocation3 + $0x29] sm:$0xff] %v1327
    %1336 = vst [vmem:[#allocation3 + $0x31] sm:$0xff] %v1328
    %1337 = vst [vmem:[#allocation3 + $0x39] sm:$0xff] %v1329
    %v1338 = vld [vmem:[#allocation3] sm:$0xff]
    %v1339 = vld [vmem:[#allocation3 + $0x8] sm:$0xff]
    %v1340 = vld [vmem:[#allocation3 + $0x10] sm:$0xff]
    %v1341 = vld [vmem:[#allocation3 + $0x18] sm:$0xff]
    %v1342 = vld [vmem:[#allocation3 + $0x20] sm:$0xff]
    %v1343 = vld [vmem:[#allocation3 + $0x28] sm:$0xff]
    %v1344 = vld [vmem:[#allocation3 + $0x30] sm:$0xff]
    %v1345 = vld [vmem:[#allocation3 + $0x38] sm:$0xff]
    %v1346 = vsel %vm442, %v1338, 0.0
    %v1347 = vsel %vm443, %v1339, 0.0
    %v1348 = vsel %vm444, %v1340, 0.0
    %v1349 = vsel %vm445, %v1341, 0.0
    %v1350 = vsel %vm446, %v1342, 0.0
    %v1351 = vsel %vm447, %v1343, 0.0
    %v1352 = vsel %vm448, %v1344, 0.0
    %v1353 = vsel %vm449, %v1345, 0.0
    %v1354 = vpack.c.bf16 %v1347, %v1346
    %v1355 = vpack.c.bf16 %v1349, %v1348
    %v1356 = vpack.c.bf16 %v1351, %v1350
    %v1357 = vpack.c.bf16 %v1353, %v1352
    %v1358 = vld [vmem:[#allocation3 + $0x1] sm:$0xff]
    %v1359 = vld [vmem:[#allocation3 + $0x9] sm:$0xff]
    %v1360 = vld [vmem:[#allocation3 + $0x11] sm:$0xff]
    %v1361 = vld [vmem:[#allocation3 + $0x19] sm:$0xff]
    %v1362 = vld [vmem:[#allocation3 + $0x21] sm:$0xff]
    %v1363 = vld [vmem:[#allocation3 + $0x29] sm:$0xff]
    %v1364 = vld [vmem:[#allocation3 + $0x31] sm:$0xff]
    %v1365 = vld [vmem:[#allocation3 + $0x39] sm:$0xff]
    %v1366 = vpack.c.bf16 %v1359, %v1358
    %v1367 = vpack.c.bf16 %v1361, %v1360
    %v1368 = vpack.c.bf16 %v1363, %v1362
    %v1369 = vpack.c.bf16 %v1365, %v1364
    %v1370 = vld [vmem:[#allocation3 + $0x2] sm:$0xff]
    %v1371 = vld [vmem:[#allocation3 + $0xa] sm:$0xff]
    %v1372 = vld [vmem:[#allocation3 + $0x12] sm:$0xff]
    %v1373 = vld [vmem:[#allocation3 + $0x1a] sm:$0xff]
    %v1374 = vld [vmem:[#allocation3 + $0x22] sm:$0xff]
    %v1375 = vld [vmem:[#allocation3 + $0x2a] sm:$0xff]
    %v1376 = vld [vmem:[#allocation3 + $0x32] sm:$0xff]
    %v1377 = vld [vmem:[#allocation3 + $0x3a] sm:$0xff]
    %v1378 = vsel %vm538, %v1370, 0.0
    %v1379 = vsel %vm539, %v1371, 0.0
    %v1380 = vsel %vm540, %v1372, 0.0
    %v1381 = vsel %vm541, %v1373, 0.0
    %v1382 = vsel %vm542, %v1374, 0.0
    %v1383 = vsel %vm543, %v1375, 0.0
    %v1384 = vsel %vm544, %v1376, 0.0
    %v1385 = vsel %vm545, %v1377, 0.0
    %v1386 = vpack.c.bf16 %v1379, %v1378
    %v1387 = vpack.c.bf16 %v1381, %v1380
    %v1388 = vpack.c.bf16 %v1383, %v1382
    %v1389 = vpack.c.bf16 %v1385, %v1384
    %v1390 = vld [vmem:[#allocation9] sm:$0xf]
    %v1391 = vld [vmem:[#allocation9 + $0x4] sm:$0xf]
    %v1392 = vld [vmem:[#allocation9 + $0x8] sm:$0xf]
    %v1393 = vld [vmem:[#allocation9 + $0xc] sm:$0xf]
    %v1394 = vld [vmem:[#allocation9 + $0x10] sm:$0xf]
    %v1395 = vld [vmem:[#allocation9 + $0x14] sm:$0xf]
    %v1396 = vld [vmem:[#allocation9 + $0x18] sm:$0xf]
    %v1397 = vld [vmem:[#allocation9 + $0x1c] sm:$0xf]
    %v1398 = vld [vmem:[#allocation9 + $0x20] sm:$0xf]
    %v1399 = vld [vmem:[#allocation9 + $0x24] sm:$0xf]
    %v1400 = vld [vmem:[#allocation9 + $0x28] sm:$0xf]
    %v1401 = vld [vmem:[#allocation9 + $0x2c] sm:$0xf]
    %v1402 = vld [vmem:[#allocation9 + $0x30] sm:$0xf]
    %v1403 = vld [vmem:[#allocation9 + $0x34] sm:$0xf]
    %v1404 = vld [vmem:[#allocation9 + $0x38] sm:$0xf]
    %v1405 = vld [vmem:[#allocation9 + $0x3c] sm:$0xf]
    %s1406 = scalar_lea.vmem [#allocation9], 64
    %v1407 = vld [vmem:[%s1406] sm:$0xf]
    %v1408 = vld [vmem:[%s1406 + $0x4] sm:$0xf]
    %v1409 = vld [vmem:[%s1406 + $0x8] sm:$0xf]
    %v1410 = vld [vmem:[%s1406 + $0xc] sm:$0xf]
    %v1411 = vld [vmem:[%s1406 + $0x10] sm:$0xf]
    %v1412 = vld [vmem:[%s1406 + $0x14] sm:$0xf]
    %v1413 = vld [vmem:[%s1406 + $0x18] sm:$0xf]
    %v1414 = vld [vmem:[%s1406 + $0x1c] sm:$0xf]
    %v1415 = vld [vmem:[%s1406 + $0x20] sm:$0xf]
    %v1416 = vld [vmem:[%s1406 + $0x24] sm:$0xf]
    %v1417 = vld [vmem:[%s1406 + $0x28] sm:$0xf]
    %v1418 = vld [vmem:[%s1406 + $0x2c] sm:$0xf]
    %v1419 = vld [vmem:[%s1406 + $0x30] sm:$0xf]
    %v1420 = vld [vmem:[%s1406 + $0x34] sm:$0xf]
    %v1421 = vld [vmem:[%s1406 + $0x38] sm:$0xf]
    %v1422 = vld [vmem:[%s1406 + $0x3c] sm:$0xf]
    %v1439 = vunpack.c.l.b16 %v1407
    %v1440 = vunpack.c.l.b16 %v1408
    %v1441 = vunpack.c.l.b16 %v1409
    %v1442 = vunpack.c.l.b16 %v1410
    %v1443 = vunpack.c.l.b16 %v1411
    %v1444 = vunpack.c.l.b16 %v1412
    %v1445 = vunpack.c.l.b16 %v1413
    %v1446 = vunpack.c.l.b16 %v1414
    %v1447 = vunpack.c.l.b16 %v1415
    %v1448 = vunpack.c.l.b16 %v1416
    %v1449 = vunpack.c.l.b16 %v1417
    %v1450 = vunpack.c.l.b16 %v1418
    %v1451 = vunpack.c.l.b16 %v1419
    %v1452 = vunpack.c.l.b16 %v1420
    %v1453 = vunpack.c.l.b16 %v1421
    %v1454 = vunpack.c.l.b16 %v1422
    %v1455 = vpack.c.b16 %v1440, %v1439
    %v1456 = vpack.c.b16 %v1442, %v1441
    %v1457 = vpack.c.b16 %v1444, %v1443
    %v1458 = vpack.c.b16 %v1446, %v1445
    %v1459 = vpack.c.b16 %v1448, %v1447
    %v1460 = vpack.c.b16 %v1450, %v1449
    %v1461 = vpack.c.b16 %v1452, %v1451
    %v1462 = vpack.c.b16 %v1454, %v1453
    %1471 = vmatprep.subr.bf16.mxu0 0
    %1472 = vmatpush1.bf16.msra.mxu0 %v1455
    %1473 = vmatprep.subr.bf16.mxu0 0
    %1474 = vmatpush1.bf16.msra.mxu0 %v1456
    %1475 = vmatprep.subr.bf16.mxu0 0
    %1476 = vmatpush1.bf16.msra.mxu0 %v1457
    %1477 = vmatprep.subr.bf16.mxu0 0
    %1478 = vmatpush1.bf16.msra.mxu0 %v1458
    %1479 = vmatprep.subr.bf16.mxu0 0
    %1480 = vmatpush1.bf16.msra.mxu0 %v1459
    %1481 = vmatprep.subr.bf16.mxu0 0
    %1482 = vmatpush1.bf16.msra.mxu0 %v1460
    %1483 = vmatprep.subr.bf16.mxu0 0
    %1484 = vmatpush1.bf16.msra.mxu0 %v1461
    %1485 = vmatprep.subr.bf16.mxu0 0
    %1486 = vmatpush1.bf16.msra.mxu0 %v1462
    %1487 = vmatprep.subr.bf16.mxu0 0
    %1488 = vmatpush1.bf16.msra.mxu0 0
    %1489 = vmatprep.subr.bf16.mxu0 0
    %1490 = vmatpush1.bf16.msra.mxu0 0
    %1491 = vmatprep.subr.bf16.mxu0 0
    %1492 = vmatpush1.bf16.msra.mxu0 0
    %1493 = vmatprep.subr.bf16.mxu0 0
    %1494 = vmatpush1.bf16.msra.mxu0 0
    %1495 = vmatprep.subr.bf16.mxu0 0
    %1496 = vmatpush1.bf16.msra.mxu0 0
    %1497 = vmatprep.subr.bf16.mxu0 0
    %1498 = vmatpush1.bf16.msra.mxu0 0
    %1499 = vmatprep.subr.bf16.mxu0 0
    %1500 = vmatpush1.bf16.msra.mxu0 0
    %1501 = vmatprep.subr.bf16.mxu0 0
    %1502 = vmatpush1.bf16.msra.mxu0 0
    %1503 = vmatprep.mubr.bf16.mxu0 0
    %1504 = vmatmul.mubr.bf16.gmra.mrb[0].mxu0 %v1366
    %v1505 = vpop.f32.mrb[0].mxu0
    %v1506 = vadd.f32 0.0, %v1505
    %v1507 = vpop.f32.mrb[0].mxu0
    %v1508 = vpop.f32.mrb[0].mxu0
    %v1509 = vadd.f32 0.0, %v1508
    %v1510 = vpop.f32.mrb[0].mxu0
    %1511 = vmatprep.mubr.bf16.mxu0 0
    %1512 = vmatmul.mubr.bf16.gmra.mrb[0].mxu0 %v1367
    %v1513 = vpop.f32.mrb[0].mxu0
    %v1514 = vadd.f32 0.0, %v1513
    %v1515 = vpop.f32.mrb[0].mxu0
    %v1516 = vpop.f32.mrb[0].mxu0
    %v1517 = vadd.f32 0.0, %v1516
    %v1518 = vpop.f32.mrb[0].mxu0
    %1519 = vmatprep.mubr.bf16.mxu0 0
    %1520 = vmatmul.mubr.bf16.gmra.mrb[0].mxu0 %v1368
    %v1521 = vpop.f32.mrb[0].mxu0
    %v1522 = vadd.f32 0.0, %v1521
    %v1523 = vpop.f32.mrb[0].mxu0
    %v1524 = vpop.f32.mrb[0].mxu0
    %v1525 = vadd.f32 0.0, %v1524
    %v1526 = vpop.f32.mrb[0].mxu0
    %1527 = vmatprep.mubr.bf16.mxu0 0
    %1528 = vmatmul.mubr.bf16.gmra.mrb[0].mxu0 %v1369
    %v1529 = vpop.f32.mrb[0].mxu0
    %v1530 = vadd.f32 0.0, %v1529
    %v1531 = vpop.f32.mrb[0].mxu0
    %v1532 = vpop.f32.mrb[0].mxu0
    %v1533 = vadd.f32 0.0, %v1532
    %v1534 = vpop.f32.mrb[0].mxu0
    %1535 = vdwg.mxu0
    %v1552 = vunpack.c.l.b16 %v1390
    %v1553 = vunpack.c.l.b16 %v1391
    %v1554 = vunpack.c.l.b16 %v1392
    %v1555 = vunpack.c.l.b16 %v1393
    %v1556 = vunpack.c.l.b16 %v1394
    %v1557 = vunpack.c.l.b16 %v1395
    %v1558 = vunpack.c.l.b16 %v1396
    %v1559 = vunpack.c.l.b16 %v1397
    %v1560 = vunpack.c.l.b16 %v1398
    %v1561 = vunpack.c.l.b16 %v1399
    %v1562 = vunpack.c.l.b16 %v1400
    %v1563 = vunpack.c.l.b16 %v1401
    %v1564 = vunpack.c.l.b16 %v1402
    %v1565 = vunpack.c.l.b16 %v1403
    %v1566 = vunpack.c.l.b16 %v1404
    %v1567 = vunpack.c.l.b16 %v1405
    %v1568 = vpack.c.b16 %v1553, %v1552
    %v1569 = vpack.c.b16 %v1555, %v1554
    %v1570 = vpack.c.b16 %v1557, %v1556
    %v1571 = vpack.c.b16 %v1559, %v1558
    %v1572 = vpack.c.b16 %v1561, %v1560
    %v1573 = vpack.c.b16 %v1563, %v1562
    %v1574 = vpack.c.b16 %v1565, %v1564
    %v1575 = vpack.c.b16 %v1567, %v1566
    %1584 = vmatprep.subr.bf16.mxu0 0
    %1585 = vmatpush1.bf16.msra.mxu0 %v1568
    %1586 = vmatprep.subr.bf16.mxu0 0
    %1587 = vmatpush1.bf16.msra.mxu0 %v1569
    %1588 = vmatprep.subr.bf16.mxu0 0
    %1589 = vmatpush1.bf16.msra.mxu0 %v1570
    %1590 = vmatprep.subr.bf16.mxu0 0
    %1591 = vmatpush1.bf16.msra.mxu0 %v1571
    %1592 = vmatprep.subr.bf16.mxu0 0
    %1593 = vmatpush1.bf16.msra.mxu0 %v1572
    %1594 = vmatprep.subr.bf16.mxu0 0
    %1595 = vmatpush1.bf16.msra.mxu0 %v1573
    %1596 = vmatprep.subr.bf16.mxu0 0
    %1597 = vmatpush1.bf16.msra.mxu0 %v1574
    %1598 = vmatprep.subr.bf16.mxu0 0
    %1599 = vmatpush1.bf16.msra.mxu0 %v1575
    %1600 = vmatprep.subr.bf16.mxu0 0
    %1601 = vmatpush1.bf16.msra.mxu0 0
    %1602 = vmatprep.subr.bf16.mxu0 0
    %1603 = vmatpush1.bf16.msra.mxu0 0
    %1604 = vmatprep.subr.bf16.mxu0 0
    %1605 = vmatpush1.bf16.msra.mxu0 0
    %1606 = vmatprep.subr.bf16.mxu0 0
    %1607 = vmatpush1.bf16.msra.mxu0 0
    %1608 = vmatprep.subr.bf16.mxu0 0
    %1609 = vmatpush1.bf16.msra.mxu0 0
    %1610 = vmatprep.subr.bf16.mxu0 0
    %1611 = vmatpush1.bf16.msra.mxu0 0
    %1612 = vmatprep.subr.bf16.mxu0 0
    %1613 = vmatpush1.bf16.msra.mxu0 0
    %1614 = vmatprep.subr.bf16.mxu0 0
    %1615 = vmatpush1.bf16.msra.mxu0 0
    %1616 = vmatprep.mubr.bf16.mxu0 0
    %1617 = vmatmul.mubr.bf16.gmra.mrb[0].mxu0 %v1354
    %v1618 = vpop.f32.mrb[0].mxu0
    %v1619 = vadd.f32 %v1506, %v1618
    %v1620 = vpop.f32.mrb[0].mxu0
    %v1621 = vpop.f32.mrb[0].mxu0
    %v1622 = vadd.f32 %v1509, %v1621
    %v1623 = vpop.f32.mrb[0].mxu0
    %1624 = vmatprep.mubr.bf16.mxu0 0
    %1625 = vmatmul.mubr.bf16.gmra.mrb[0].mxu0 %v1355
    %v1626 = vpop.f32.mrb[0].mxu0
    %v1627 = vadd.f32 %v1514, %v1626
    %v1628 = vpop.f32.mrb[0].mxu0
    %v1629 = vpop.f32.mrb[0].mxu0
    %v1630 = vadd.f32 %v1517, %v1629
    %v1631 = vpop.f32.mrb[0].mxu0
    %1632 = vmatprep.mubr.bf16.mxu0 0
    %1633 = vmatmul.mubr.bf16.gmra.mrb[0].mxu0 %v1356
    %v1634 = vpop.f32.mrb[0].mxu0
    %v1635 = vadd.f32 %v1522, %v1634
    %v1636 = vpop.f32.mrb[0].mxu0
    %v1637 = vpop.f32.mrb[0].mxu0
    %v1638 = vadd.f32 %v1525, %v1637
    %v1639 = vpop.f32.mrb[0].mxu0
    %1640 = vmatprep.mubr.bf16.mxu0 0
    %1641 = vmatmul.mubr.bf16.gmra.mrb[0].mxu0 %v1357
    %v1642 = vpop.f32.mrb[0].mxu0
    %v1643 = vadd.f32 %v1530, %v1642
    %v1644 = vpop.f32.mrb[0].mxu0
    %v1645 = vpop.f32.mrb[0].mxu0
    %v1646 = vadd.f32 %v1533, %v1645
    %v1647 = vpop.f32.mrb[0].mxu0
    %1648 = vdwg.mxu0
    %s1649 = scalar_lea.vmem [#allocation9], 128
    %v1650 = vld [vmem:[%s1649] sm:$0xf]
    %v1651 = vld [vmem:[%s1649 + $0x4] sm:$0xf]
    %v1652 = vld [vmem:[%s1649 + $0x8] sm:$0xf]
    %v1653 = vld [vmem:[%s1649 + $0xc] sm:$0xf]
    %v1654 = vld [vmem:[%s1649 + $0x10] sm:$0xf]
    %v1655 = vld [vmem:[%s1649 + $0x14] sm:$0xf]
    %v1656 = vld [vmem:[%s1649 + $0x18] sm:$0xf]
    %v1657 = vld [vmem:[%s1649 + $0x1c] sm:$0xf]
    %v1658 = vld [vmem:[%s1649 + $0x20] sm:$0xf]
    %v1659 = vld [vmem:[%s1649 + $0x24] sm:$0xf]
    %v1660 = vld [vmem:[%s1649 + $0x28] sm:$0xf]
    %v1661 = vld [vmem:[%s1649 + $0x2c] sm:$0xf]
    %v1662 = vld [vmem:[%s1649 + $0x30] sm:$0xf]
    %v1663 = vld [vmem:[%s1649 + $0x34] sm:$0xf]
    %v1664 = vld [vmem:[%s1649 + $0x38] sm:$0xf]
    %v1665 = vld [vmem:[%s1649 + $0x3c] sm:$0xf]
    %v1682 = vunpack.c.l.b16 %v1650
    %v1683 = vunpack.c.l.b16 %v1651
    %v1684 = vunpack.c.l.b16 %v1652
    %v1685 = vunpack.c.l.b16 %v1653
    %v1686 = vunpack.c.l.b16 %v1654
    %v1687 = vunpack.c.l.b16 %v1655
    %v1688 = vunpack.c.l.b16 %v1656
    %v1689 = vunpack.c.l.b16 %v1657
    %v1690 = vunpack.c.l.b16 %v1658
    %v1691 = vunpack.c.l.b16 %v1659
    %v1692 = vunpack.c.l.b16 %v1660
    %v1693 = vunpack.c.l.b16 %v1661
    %v1694 = vunpack.c.l.b16 %v1662
    %v1695 = vunpack.c.l.b16 %v1663
    %v1696 = vunpack.c.l.b16 %v1664
    %v1697 = vunpack.c.l.b16 %v1665
    %v1698 = vpack.c.b16 %v1683, %v1682
    %v1699 = vpack.c.b16 %v1685, %v1684
    %v1700 = vpack.c.b16 %v1687, %v1686
    %v1701 = vpack.c.b16 %v1689, %v1688
    %v1702 = vpack.c.b16 %v1691, %v1690
    %v1703 = vpack.c.b16 %v1693, %v1692
    %v1704 = vpack.c.b16 %v1695, %v1694
    %v1705 = vpack.c.b16 %v1697, %v1696
    %1714 = vmatprep.subr.bf16.mxu0 0
    %1715 = vmatpush1.bf16.msra.mxu0 %v1698
    %1716 = vmatprep.subr.bf16.mxu0 0
    %1717 = vmatpush1.bf16.msra.mxu0 %v1699
    %1718 = vmatprep.subr.bf16.mxu0 0
    %1719 = vmatpush1.bf16.msra.mxu0 %v1700
    %1720 = vmatprep.subr.bf16.mxu0 0
    %1721 = vmatpush1.bf16.msra.mxu0 %v1701
    %1722 = vmatprep.subr.bf16.mxu0 0
    %1723 = vmatpush1.bf16.msra.mxu0 %v1702
    %1724 = vmatprep.subr.bf16.mxu0 0
    %1725 = vmatpush1.bf16.msra.mxu0 %v1703
    %1726 = vmatprep.subr.bf16.mxu0 0
    %1727 = vmatpush1.bf16.msra.mxu0 %v1704
    %1728 = vmatprep.subr.bf16.mxu0 0
    %1729 = vmatpush1.bf16.msra.mxu0 %v1705
    %1730 = vmatprep.subr.bf16.mxu0 0
    %1731 = vmatpush1.bf16.msra.mxu0 0
    %1732 = vmatprep.subr.bf16.mxu0 0
    %1733 = vmatpush1.bf16.msra.mxu0 0
    %1734 = vmatprep.subr.bf16.mxu0 0
    %1735 = vmatpush1.bf16.msra.mxu0 0
    %1736 = vmatprep.subr.bf16.mxu0 0
    %1737 = vmatpush1.bf16.msra.mxu0 0
    %1738 = vmatprep.subr.bf16.mxu0 0
    %1739 = vmatpush1.bf16.msra.mxu0 0
    %1740 = vmatprep.subr.bf16.mxu0 0
    %1741 = vmatpush1.bf16.msra.mxu0 0
    %1742 = vmatprep.subr.bf16.mxu0 0
    %1743 = vmatpush1.bf16.msra.mxu0 0
    %1744 = vmatprep.subr.bf16.mxu0 0
    %1745 = vmatpush1.bf16.msra.mxu0 0
    %1746 = vmatprep.mubr.bf16.mxu0 0
    %1747 = vmatmul.mubr.bf16.gmra.mrb[0].mxu0 %v1386
    %v1748 = vpop.f32.mrb[0].mxu0
    %v1749 = vadd.f32 0.0, %v1748
    %v1750 = vpop.f32.mrb[0].mxu0
    %v1751 = vpop.f32.mrb[0].mxu0
    %v1752 = vadd.f32 0.0, %v1751
    %v1753 = vpop.f32.mrb[0].mxu0
    %1754 = vmatprep.mubr.bf16.mxu0 0
    %1755 = vmatmul.mubr.bf16.gmra.mrb[0].mxu0 %v1387
    %v1756 = vpop.f32.mrb[0].mxu0
    %v1757 = vadd.f32 0.0, %v1756
    %v1758 = vpop.f32.mrb[0].mxu0
    %v1759 = vpop.f32.mrb[0].mxu0
    %v1760 = vadd.f32 0.0, %v1759
    %v1761 = vpop.f32.mrb[0].mxu0
    %1762 = vmatprep.mubr.bf16.mxu0 0
    %1763 = vmatmul.mubr.bf16.gmra.mrb[0].mxu0 %v1388
    %v1764 = vpop.f32.mrb[0].mxu0
    %v1765 = vadd.f32 0.0, %v1764
    %v1766 = vpop.f32.mrb[0].mxu0
    %v1767 = vpop.f32.mrb[0].mxu0
    %v1768 = vadd.f32 0.0, %v1767
    %v1769 = vpop.f32.mrb[0].mxu0
    %1770 = vmatprep.mubr.bf16.mxu0 0
    %1771 = vmatmul.mubr.bf16.gmra.mrb[0].mxu0 %v1389
    %v1772 = vpop.f32.mrb[0].mxu0
    %v1773 = vadd.f32 0.0, %v1772
    %v1774 = vpop.f32.mrb[0].mxu0
    %v1775 = vpop.f32.mrb[0].mxu0
    %v1776 = vadd.f32 0.0, %v1775
    %v1777 = vpop.f32.mrb[0].mxu0
    %1778 = vdwg.mxu0
    %v1779 = vadd.f32 %v1619, %v1749
    %v1780 = vadd.f32 %v1622, %v1752
    %v1781 = vadd.f32 %v1627, %v1757
    %v1782 = vadd.f32 %v1630, %v1760
    %v1783 = vadd.f32 %v1635, %v1765
    %v1784 = vadd.f32 %v1638, %v1768
    %v1785 = vadd.f32 %v1643, %v1773
    %v1786 = vadd.f32 %v1646, %v1776
    %v1787 = vld [vmem:[%s7 + $0x1] sm:$0x1]
    %v1788 = vlaneseq
    %v1789 = vshrl.u32 %v1788, 7
    %v1790 = vsub.s32 0, %v1789
    %v1791 = vrot.slane %v1787, %v1790
    %v1792 = vadd.f32 %v1779, %v1791
    %v1793 = vadd.f32 %v1780, %v1791
    %v1794 = vadd.f32 %v1781, %v1791
    %v1795 = vadd.f32 %v1782, %v1791
    %v1796 = vadd.f32 %v1783, %v1791
    %v1797 = vadd.f32 %v1784, %v1791
    %v1798 = vadd.f32 %v1785, %v1791
    %v1799 = vadd.f32 %v1786, %v1791
    %v1800 = vmax.f32 %v1792, 0.0
    %v1801 = vmax.f32 %v1793, 0.0
    %v1802 = vmax.f32 %v1794, 0.0
    %v1803 = vmax.f32 %v1795, 0.0
    %v1804 = vmax.f32 %v1796, 0.0
    %v1805 = vmax.f32 %v1797, 0.0
    %v1806 = vmax.f32 %v1798, 0.0
    %v1807 = vmax.f32 %v1799, 0.0
    %1808 = vst [vmem:[#allocation3 + $0x1] sm:$0xff] %v1800
    %1809 = vst [vmem:[#allocation3 + $0x9] sm:$0xff] %v1801
    %1810 = vst [vmem:[#allocation3 + $0x11] sm:$0xff] %v1802
    %1811 = vst [vmem:[#allocation3 + $0x19] sm:$0xff] %v1803
    %1812 = vst [vmem:[#allocation3 + $0x21] sm:$0xff] %v1804
    %1813 = vst [vmem:[#allocation3 + $0x29] sm:$0xff] %v1805
    %1814 = vst [vmem:[#allocation3 + $0x31] sm:$0xff] %v1806
    %1815 = vst [vmem:[#allocation3 + $0x39] sm:$0xff] %v1807
    %v1816 = vld [vmem:[#allocation3] sm:$0xff]
    %v1817 = vld [vmem:[#allocation3 + $0x8] sm:$0xff]
    %v1818 = vld [vmem:[#allocation3 + $0x10] sm:$0xff]
    %v1819 = vld [vmem:[#allocation3 + $0x18] sm:$0xff]
    %v1820 = vld [vmem:[#allocation3 + $0x20] sm:$0xff]
    %v1821 = vld [vmem:[#allocation3 + $0x28] sm:$0xff]
    %v1822 = vld [vmem:[#allocation3 + $0x30] sm:$0xff]
    %v1823 = vld [vmem:[#allocation3 + $0x38] sm:$0xff]
    %v1824 = vsel %vm442, %v1816, 0.0
    %v1825 = vsel %vm443, %v1817, 0.0
    %v1826 = vsel %vm444, %v1818, 0.0
    %v1827 = vsel %vm445, %v1819, 0.0
    %v1828 = vsel %vm446, %v1820, 0.0
    %v1829 = vsel %vm447, %v1821, 0.0
    %v1830 = vsel %vm448, %v1822, 0.0
    %v1831 = vsel %vm449, %v1823, 0.0
    %v1832 = vpack.c.bf16 %v1825, %v1824
    %v1833 = vpack.c.bf16 %v1827, %v1826
    %v1834 = vpack.c.bf16 %v1829, %v1828
    %v1835 = vpack.c.bf16 %v1831, %v1830
    %v1836 = vld [vmem:[#allocation3 + $0x1] sm:$0xff]
    %v1837 = vld [vmem:[#allocation3 + $0x9] sm:$0xff]
    %v1838 = vld [vmem:[#allocation3 + $0x11] sm:$0xff]
    %v1839 = vld [vmem:[#allocation3 + $0x19] sm:$0xff]
    %v1840 = vld [vmem:[#allocation3 + $0x21] sm:$0xff]
    %v1841 = vld [vmem:[#allocation3 + $0x29] sm:$0xff]
    %v1842 = vld [vmem:[#allocation3 + $0x31] sm:$0xff]
    %v1843 = vld [vmem:[#allocation3 + $0x39] sm:$0xff]
    %v1844 = vpack.c.bf16 %v1837, %v1836
    %v1845 = vpack.c.bf16 %v1839, %v1838
    %v1846 = vpack.c.bf16 %v1841, %v1840
    %v1847 = vpack.c.bf16 %v1843, %v1842
    %v1848 = vld [vmem:[#allocation3 + $0x2] sm:$0xff]
    %v1849 = vld [vmem:[#allocation3 + $0xa] sm:$0xff]
    %v1850 = vld [vmem:[#allocation3 + $0x12] sm:$0xff]
    %v1851 = vld [vmem:[#allocation3 + $0x1a] sm:$0xff]
    %v1852 = vld [vmem:[#allocation3 + $0x22] sm:$0xff]
    %v1853 = vld [vmem:[#allocation3 + $0x2a] sm:$0xff]
    %v1854 = vld [vmem:[#allocation3 + $0x32] sm:$0xff]
    %v1855 = vld [vmem:[#allocation3 + $0x3a] sm:$0xff]
    %v1856 = vsel %vm538, %v1848, 0.0
    %v1857 = vsel %vm539, %v1849, 0.0
    %v1858 = vsel %vm540, %v1850, 0.0
    %v1859 = vsel %vm541, %v1851, 0.0
    %v1860 = vsel %vm542, %v1852, 0.0
    %v1861 = vsel %vm543, %v1853, 0.0
    %v1862 = vsel %vm544, %v1854, 0.0
    %v1863 = vsel %vm545, %v1855, 0.0
    %v1864 = vpack.c.bf16 %v1857, %v1856
    %v1865 = vpack.c.bf16 %v1859, %v1858
    %v1866 = vpack.c.bf16 %v1861, %v1860
    %v1867 = vpack.c.bf16 %v1863, %v1862
    %v1868 = vld [vmem:[#allocation10] sm:$0xf]
    %v1869 = vld [vmem:[#allocation10 + $0x4] sm:$0xf]
    %v1870 = vld [vmem:[#allocation10 + $0x8] sm:$0xf]
    %v1871 = vld [vmem:[#allocation10 + $0xc] sm:$0xf]
    %v1872 = vld [vmem:[#allocation10 + $0x10] sm:$0xf]
    %v1873 = vld [vmem:[#allocation10 + $0x14] sm:$0xf]
    %v1874 = vld [vmem:[#allocation10 + $0x18] sm:$0xf]
    %v1875 = vld [vmem:[#allocation10 + $0x1c] sm:$0xf]
    %v1876 = vld [vmem:[#allocation10 + $0x20] sm:$0xf]
    %v1877 = vld [vmem:[#allocation10 + $0x24] sm:$0xf]
    %v1878 = vld [vmem:[#allocation10 + $0x28] sm:$0xf]
    %v1879 = vld [vmem:[#allocation10 + $0x2c] sm:$0xf]
    %v1880 = vld [vmem:[#allocation10 + $0x30] sm:$0xf]
    %v1881 = vld [vmem:[#allocation10 + $0x34] sm:$0xf]
    %v1882 = vld [vmem:[#allocation10 + $0x38] sm:$0xf]
    %v1883 = vld [vmem:[#allocation10 + $0x3c] sm:$0xf]
    %s1884 = scalar_lea.vmem [#allocation10], 64
    %v1885 = vld [vmem:[%s1884] sm:$0xf]
    %v1886 = vld [vmem:[%s1884 + $0x4] sm:$0xf]
    %v1887 = vld [vmem:[%s1884 + $0x8] sm:$0xf]
    %v1888 = vld [vmem:[%s1884 + $0xc] sm:$0xf]
    %v1889 = vld [vmem:[%s1884 + $0x10] sm:$0xf]
    %v1890 = vld [vmem:[%s1884 + $0x14] sm:$0xf]
    %v1891 = vld [vmem:[%s1884 + $0x18] sm:$0xf]
    %v1892 = vld [vmem:[%s1884 + $0x1c] sm:$0xf]
    %v1893 = vld [vmem:[%s1884 + $0x20] sm:$0xf]
    %v1894 = vld [vmem:[%s1884 + $0x24] sm:$0xf]
    %v1895 = vld [vmem:[%s1884 + $0x28] sm:$0xf]
    %v1896 = vld [vmem:[%s1884 + $0x2c] sm:$0xf]
    %v1897 = vld [vmem:[%s1884 + $0x30] sm:$0xf]
    %v1898 = vld [vmem:[%s1884 + $0x34] sm:$0xf]
    %v1899 = vld [vmem:[%s1884 + $0x38] sm:$0xf]
    %v1900 = vld [vmem:[%s1884 + $0x3c] sm:$0xf]
    %v1917 = vunpack.c.l.b16 %v1885
    %v1918 = vunpack.c.l.b16 %v1886
    %v1919 = vunpack.c.l.b16 %v1887
    %v1920 = vunpack.c.l.b16 %v1888
    %v1921 = vunpack.c.l.b16 %v1889
    %v1922 = vunpack.c.l.b16 %v1890
    %v1923 = vunpack.c.l.b16 %v1891
    %v1924 = vunpack.c.l.b16 %v1892
    %v1925 = vunpack.c.l.b16 %v1893
    %v1926 = vunpack.c.l.b16 %v1894
    %v1927 = vunpack.c.l.b16 %v1895
    %v1928 = vunpack.c.l.b16 %v1896
    %v1929 = vunpack.c.l.b16 %v1897
    %v1930 = vunpack.c.l.b16 %v1898
    %v1931 = vunpack.c.l.b16 %v1899
    %v1932 = vunpack.c.l.b16 %v1900
    %v1933 = vpack.c.b16 %v1918, %v1917
    %v1934 = vpack.c.b16 %v1920, %v1919
    %v1935 = vpack.c.b16 %v1922, %v1921
    %v1936 = vpack.c.b16 %v1924, %v1923
    %v1937 = vpack.c.b16 %v1926, %v1925
    %v1938 = vpack.c.b16 %v1928, %v1927
    %v1939 = vpack.c.b16 %v1930, %v1929
    %v1940 = vpack.c.b16 %v1932, %v1931
    %1949 = vmatprep.subr.bf16.mxu0 0
    %1950 = vmatpush1.bf16.msra.mxu0 %v1933
    %1951 = vmatprep.subr.bf16.mxu0 0
    %1952 = vmatpush1.bf16.msra.mxu0 %v1934
    %1953 = vmatprep.subr.bf16.mxu0 0
    %1954 = vmatpush1.bf16.msra.mxu0 %v1935
    %1955 = vmatprep.subr.bf16.mxu0 0
    %1956 = vmatpush1.bf16.msra.mxu0 %v1936
    %1957 = vmatprep.subr.bf16.mxu0 0
    %1958 = vmatpush1.bf16.msra.mxu0 %v1937
    %1959 = vmatprep.subr.bf16.mxu0 0
    %1960 = vmatpush1.bf16.msra.mxu0 %v1938
    %1961 = vmatprep.subr.bf16.mxu0 0
    %1962 = vmatpush1.bf16.msra.mxu0 %v1939
    %1963 = vmatprep.subr.bf16.mxu0 0
    %1964 = vmatpush1.bf16.msra.mxu0 %v1940
    %1965 = vmatprep.subr.bf16.mxu0 0
    %1966 = vmatpush1.bf16.msra.mxu0 0
    %1967 = vmatprep.subr.bf16.mxu0 0
    %1968 = vmatpush1.bf16.msra.mxu0 0
    %1969 = vmatprep.subr.bf16.mxu0 0
    %1970 = vmatpush1.bf16.msra.mxu0 0
    %1971 = vmatprep.subr.bf16.mxu0 0
    %1972 = vmatpush1.bf16.msra.mxu0 0
    %1973 = vmatprep.subr.bf16.mxu0 0
    %1974 = vmatpush1.bf16.msra.mxu0 0
    %1975 = vmatprep.subr.bf16.mxu0 0
    %1976 = vmatpush1.bf16.msra.mxu0 0
    %1977 = vmatprep.subr.bf16.mxu0 0
    %1978 = vmatpush1.bf16.msra.mxu0 0
    %1979 = vmatprep.subr.bf16.mxu0 0
    %1980 = vmatpush1.bf16.msra.mxu0 0
    %1981 = vmatprep.mubr.bf16.mxu0 0
    %1982 = vmatmul.mubr.bf16.gmra.mrb[0].mxu0 %v1844
    %v1983 = vpop.f32.mrb[0].mxu0
    %v1984 = vadd.f32 0.0, %v1983
    %v1985 = vpop.f32.mrb[0].mxu0
    %v1986 = vpop.f32.mrb[0].mxu0
    %v1987 = vadd.f32 0.0, %v1986
    %v1988 = vpop.f32.mrb[0].mxu0
    %1989 = vmatprep.mubr.bf16.mxu0 0
    %1990 = vmatmul.mubr.bf16.gmra.mrb[0].mxu0 %v1845
    %v1991 = vpop.f32.mrb[0].mxu0
    %v1992 = vadd.f32 0.0, %v1991
    %v1993 = vpop.f32.mrb[0].mxu0
    %v1994 = vpop.f32.mrb[0].mxu0
    %v1995 = vadd.f32 0.0, %v1994
    %v1996 = vpop.f32.mrb[0].mxu0
    %1997 = vmatprep.mubr.bf16.mxu0 0
    %1998 = vmatmul.mubr.bf16.gmra.mrb[0].mxu0 %v1846
    %v1999 = vpop.f32.mrb[0].mxu0
    %v2000 = vadd.f32 0.0, %v1999
    %v2001 = vpop.f32.mrb[0].mxu0
    %v2002 = vpop.f32.mrb[0].mxu0
    %v2003 = vadd.f32 0.0, %v2002
    %v2004 = vpop.f32.mrb[0].mxu0
    %2005 = vmatprep.mubr.bf16.mxu0 0
    %2006 = vmatmul.mubr.bf16.gmra.mrb[0].mxu0 %v1847
    %v2007 = vpop.f32.mrb[0].mxu0
    %v2008 = vadd.f32 0.0, %v2007
    %v2009 = vpop.f32.mrb[0].mxu0
    %v2010 = vpop.f32.mrb[0].mxu0
    %v2011 = vadd.f32 0.0, %v2010
    %v2012 = vpop.f32.mrb[0].mxu0
    %2013 = vdwg.mxu0
    %v2030 = vunpack.c.l.b16 %v1868
    %v2031 = vunpack.c.l.b16 %v1869
    %v2032 = vunpack.c.l.b16 %v1870
    %v2033 = vunpack.c.l.b16 %v1871
    %v2034 = vunpack.c.l.b16 %v1872
    %v2035 = vunpack.c.l.b16 %v1873
    %v2036 = vunpack.c.l.b16 %v1874
    %v2037 = vunpack.c.l.b16 %v1875
    %v2038 = vunpack.c.l.b16 %v1876
    %v2039 = vunpack.c.l.b16 %v1877
    %v2040 = vunpack.c.l.b16 %v1878
    %v2041 = vunpack.c.l.b16 %v1879
    %v2042 = vunpack.c.l.b16 %v1880
    %v2043 = vunpack.c.l.b16 %v1881
    %v2044 = vunpack.c.l.b16 %v1882
    %v2045 = vunpack.c.l.b16 %v1883
    %v2046 = vpack.c.b16 %v2031, %v2030
    %v2047 = vpack.c.b16 %v2033, %v2032
    %v2048 = vpack.c.b16 %v2035, %v2034
    %v2049 = vpack.c.b16 %v2037, %v2036
    %v2050 = vpack.c.b16 %v2039, %v2038
    %v2051 = vpack.c.b16 %v2041, %v2040
    %v2052 = vpack.c.b16 %v2043, %v2042
    %v2053 = vpack.c.b16 %v2045, %v2044
    %2062 = vmatprep.subr.bf16.mxu0 0
    %2063 = vmatpush1.bf16.msra.mxu0 %v2046
    %2064 = vmatprep.subr.bf16.mxu0 0
    %2065 = vmatpush1.bf16.msra.mxu0 %v2047
    %2066 = vmatprep.subr.bf16.mxu0 0
    %2067 = vmatpush1.bf16.msra.mxu0 %v2048
    %2068 = vmatprep.subr.bf16.mxu0 0
    %2069 = vmatpush1.bf16.msra.mxu0 %v2049
    %2070 = vmatprep.subr.bf16.mxu0 0
    %2071 = vmatpush1.bf16.msra.mxu0 %v2050
    %2072 = vmatprep.subr.bf16.mxu0 0
    %2073 = vmatpush1.bf16.msra.mxu0 %v2051
    %2074 = vmatprep.subr.bf16.mxu0 0
    %2075 = vmatpush1.bf16.msra.mxu0 %v2052
    %2076 = vmatprep.subr.bf16.mxu0 0
    %2077 = vmatpush1.bf16.msra.mxu0 %v2053
    %2078 = vmatprep.subr.bf16.mxu0 0
    %2079 = vmatpush1.bf16.msra.mxu0 0
    %2080 = vmatprep.subr.bf16.mxu0 0
    %2081 = vmatpush1.bf16.msra.mxu0 0
    %2082 = vmatprep.subr.bf16.mxu0 0
    %2083 = vmatpush1.bf16.msra.mxu0 0
    %2084 = vmatprep.subr.bf16.mxu0 0
    %2085 = vmatpush1.bf16.msra.mxu0 0
    %2086 = vmatprep.subr.bf16.mxu0 0
    %2087 = vmatpush1.bf16.msra.mxu0 0
    %2088 = vmatprep.subr.bf16.mxu0 0
    %2089 = vmatpush1.bf16.msra.mxu0 0
    %2090 = vmatprep.subr.bf16.mxu0 0
    %2091 = vmatpush1.bf16.msra.mxu0 0
    %2092 = vmatprep.subr.bf16.mxu0 0
    %2093 = vmatpush1.bf16.msra.mxu0 0
    %2094 = vmatprep.mubr.bf16.mxu0 0
    %2095 = vmatmul.mubr.bf16.gmra.mrb[0].mxu0 %v1832
    %v2096 = vpop.f32.mrb[0].mxu0
    %v2097 = vadd.f32 %v1984, %v2096
    %v2098 = vpop.f32.mrb[0].mxu0
    %v2099 = vpop.f32.mrb[0].mxu0
    %v2100 = vadd.f32 %v1987, %v2099
    %v2101 = vpop.f32.mrb[0].mxu0
    %2102 = vmatprep.mubr.bf16.mxu0 0
    %2103 = vmatmul.mubr.bf16.gmra.mrb[0].mxu0 %v1833
    %v2104 = vpop.f32.mrb[0].mxu0
    %v2105 = vadd.f32 %v1992, %v2104
    %v2106 = vpop.f32.mrb[0].mxu0
    %v2107 = vpop.f32.mrb[0].mxu0
    %v2108 = vadd.f32 %v1995, %v2107
    %v2109 = vpop.f32.mrb[0].mxu0
    %2110 = vmatprep.mubr.bf16.mxu0 0
    %2111 = vmatmul.mubr.bf16.gmra.mrb[0].mxu0 %v1834
    %v2112 = vpop.f32.mrb[0].mxu0
    %v2113 = vadd.f32 %v2000, %v2112
    %v2114 = vpop.f32.mrb[0].mxu0
    %v2115 = vpop.f32.mrb[0].mxu0
    %v2116 = vadd.f32 %v2003, %v2115
    %v2117 = vpop.f32.mrb[0].mxu0
    %2118 = vmatprep.mubr.bf16.mxu0 0
    %2119 = vmatmul.mubr.bf16.gmra.mrb[0].mxu0 %v1835
    %v2120 = vpop.f32.mrb[0].mxu0
    %v2121 = vadd.f32 %v2008, %v2120
    %v2122 = vpop.f32.mrb[0].mxu0
    %v2123 = vpop.f32.mrb[0].mxu0
    %v2124 = vadd.f32 %v2011, %v2123
    %v2125 = vpop.f32.mrb[0].mxu0
    %2126 = vdwg.mxu0
    %s2127 = scalar_lea.vmem [#allocation10], 128
    %v2128 = vld [vmem:[%s2127] sm:$0xf]
    %v2129 = vld [vmem:[%s2127 + $0x4] sm:$0xf]
    %v2130 = vld [vmem:[%s2127 + $0x8] sm:$0xf]
    %v2131 = vld [vmem:[%s2127 + $0xc] sm:$0xf]
    %v2132 = vld [vmem:[%s2127 + $0x10] sm:$0xf]
    %v2133 = vld [vmem:[%s2127 + $0x14] sm:$0xf]
    %v2134 = vld [vmem:[%s2127 + $0x18] sm:$0xf]
    %v2135 = vld [vmem:[%s2127 + $0x1c] sm:$0xf]
    %v2136 = vld [vmem:[%s2127 + $0x20] sm:$0xf]
    %v2137 = vld [vmem:[%s2127 + $0x24] sm:$0xf]
    %v2138 = vld [vmem:[%s2127 + $0x28] sm:$0xf]
    %v2139 = vld [vmem:[%s2127 + $0x2c] sm:$0xf]
    %v2140 = vld [vmem:[%s2127 + $0x30] sm:$0xf]
    %v2141 = vld [vmem:[%s2127 + $0x34] sm:$0xf]
    %v2142 = vld [vmem:[%s2127 + $0x38] sm:$0xf]
    %v2143 = vld [vmem:[%s2127 + $0x3c] sm:$0xf]
    %v2160 = vunpack.c.l.b16 %v2128
    %v2161 = vunpack.c.l.b16 %v2129
    %v2162 = vunpack.c.l.b16 %v2130
    %v2163 = vunpack.c.l.b16 %v2131
    %v2164 = vunpack.c.l.b16 %v2132
    %v2165 = vunpack.c.l.b16 %v2133
    %v2166 = vunpack.c.l.b16 %v2134
    %v2167 = vunpack.c.l.b16 %v2135
    %v2168 = vunpack.c.l.b16 %v2136
    %v2169 = vunpack.c.l.b16 %v2137
    %v2170 = vunpack.c.l.b16 %v2138
    %v2171 = vunpack.c.l.b16 %v2139
    %v2172 = vunpack.c.l.b16 %v2140
    %v2173 = vunpack.c.l.b16 %v2141
    %v2174 = vunpack.c.l.b16 %v2142
    %v2175 = vunpack.c.l.b16 %v2143
    %v2176 = vpack.c.b16 %v2161, %v2160
    %v2177 = vpack.c.b16 %v2163, %v2162
    %v2178 = vpack.c.b16 %v2165, %v2164
    %v2179 = vpack.c.b16 %v2167, %v2166
    %v2180 = vpack.c.b16 %v2169, %v2168
    %v2181 = vpack.c.b16 %v2171, %v2170
    %v2182 = vpack.c.b16 %v2173, %v2172
    %v2183 = vpack.c.b16 %v2175, %v2174
    %2192 = vmatprep.subr.bf16.mxu0 0
    %2193 = vmatpush1.bf16.msra.mxu0 %v2176
    %2194 = vmatprep.subr.bf16.mxu0 0
    %2195 = vmatpush1.bf16.msra.mxu0 %v2177
    %2196 = vmatprep.subr.bf16.mxu0 0
    %2197 = vmatpush1.bf16.msra.mxu0 %v2178
    %2198 = vmatprep.subr.bf16.mxu0 0
    %2199 = vmatpush1.bf16.msra.mxu0 %v2179
    %2200 = vmatprep.subr.bf16.mxu0 0
    %2201 = vmatpush1.bf16.msra.mxu0 %v2180
    %2202 = vmatprep.subr.bf16.mxu0 0
    %2203 = vmatpush1.bf16.msra.mxu0 %v2181
    %2204 = vmatprep.subr.bf16.mxu0 0
    %2205 = vmatpush1.bf16.msra.mxu0 %v2182
    %2206 = vmatprep.subr.bf16.mxu0 0
    %2207 = vmatpush1.bf16.msra.mxu0 %v2183
    %2208 = vmatprep.subr.bf16.mxu0 0
    %2209 = vmatpush1.bf16.msra.mxu0 0
    %2210 = vmatprep.subr.bf16.mxu0 0
    %2211 = vmatpush1.bf16.msra.mxu0 0
    %2212 = vmatprep.subr.bf16.mxu0 0
    %2213 = vmatpush1.bf16.msra.mxu0 0
    %2214 = vmatprep.subr.bf16.mxu0 0
    %2215 = vmatpush1.bf16.msra.mxu0 0
    %2216 = vmatprep.subr.bf16.mxu0 0
    %2217 = vmatpush1.bf16.msra.mxu0 0
    %2218 = vmatprep.subr.bf16.mxu0 0
    %2219 = vmatpush1.bf16.msra.mxu0 0
    %2220 = vmatprep.subr.bf16.mxu0 0
    %2221 = vmatpush1.bf16.msra.mxu0 0
    %2222 = vmatprep.subr.bf16.mxu0 0
    %2223 = vmatpush1.bf16.msra.mxu0 0
    %2224 = vmatprep.mubr.bf16.mxu0 0
    %2225 = vmatmul.mubr.bf16.gmra.mrb[0].mxu0 %v1864
    %v2226 = vpop.f32.mrb[0].mxu0
    %v2227 = vadd.f32 0.0, %v2226
    %v2228 = vpop.f32.mrb[0].mxu0
    %v2229 = vpop.f32.mrb[0].mxu0
    %v2230 = vadd.f32 0.0, %v2229
    %v2231 = vpop.f32.mrb[0].mxu0
    %2232 = vmatprep.mubr.bf16.mxu0 0
    %2233 = vmatmul.mubr.bf16.gmra.mrb[0].mxu0 %v1865
    %v2234 = vpop.f32.mrb[0].mxu0
    %v2235 = vadd.f32 0.0, %v2234
    %v2236 = vpop.f32.mrb[0].mxu0
    %v2237 = vpop.f32.mrb[0].mxu0
    %v2238 = vadd.f32 0.0, %v2237
    %v2239 = vpop.f32.mrb[0].mxu0
    %2240 = vmatprep.mubr.bf16.mxu0 0
    %2241 = vmatmul.mubr.bf16.gmra.mrb[0].mxu0 %v1866
    %v2242 = vpop.f32.mrb[0].mxu0
    %v2243 = vadd.f32 0.0, %v2242
    %v2244 = vpop.f32.mrb[0].mxu0
    %v2245 = vpop.f32.mrb[0].mxu0
    %v2246 = vadd.f32 0.0, %v2245
    %v2247 = vpop.f32.mrb[0].mxu0
    %2248 = vmatprep.mubr.bf16.mxu0 0
    %2249 = vmatmul.mubr.bf16.gmra.mrb[0].mxu0 %v1867
    %v2250 = vpop.f32.mrb[0].mxu0
    %v2251 = vadd.f32 0.0, %v2250
    %v2252 = vpop.f32.mrb[0].mxu0
    %v2253 = vpop.f32.mrb[0].mxu0
    %v2254 = vadd.f32 0.0, %v2253
    %v2255 = vpop.f32.mrb[0].mxu0
    %2256 = vdwg.mxu0
    %v2257 = vadd.f32 %v2097, %v2227
    %v2258 = vadd.f32 %v2100, %v2230
    %v2259 = vadd.f32 %v2105, %v2235
    %v2260 = vadd.f32 %v2108, %v2238
    %v2261 = vadd.f32 %v2113, %v2243
    %v2262 = vadd.f32 %v2116, %v2246
    %v2263 = vadd.f32 %v2121, %v2251
    %v2264 = vadd.f32 %v2124, %v2254
    %v2265 = vld [vmem:[%s7 + $0x2] sm:$0x1]
    %v2266 = vlaneseq
    %v2267 = vshrl.u32 %v2266, 7
    %v2268 = vsub.s32 0, %v2267
    %v2269 = vrot.slane %v2265, %v2268
    %v2270 = vadd.f32 %v2257, %v2269
    %v2271 = vadd.f32 %v2258, %v2269
    %v2272 = vadd.f32 %v2259, %v2269
    %v2273 = vadd.f32 %v2260, %v2269
    %v2274 = vadd.f32 %v2261, %v2269
    %v2275 = vadd.f32 %v2262, %v2269
    %v2276 = vadd.f32 %v2263, %v2269
    %v2277 = vadd.f32 %v2264, %v2269
    %v2278 = vmax.f32 %v2270, 0.0
    %v2279 = vmax.f32 %v2271, 0.0
    %v2280 = vmax.f32 %v2272, 0.0
    %v2281 = vmax.f32 %v2273, 0.0
    %v2282 = vmax.f32 %v2274, 0.0
    %v2283 = vmax.f32 %v2275, 0.0
    %v2284 = vmax.f32 %v2276, 0.0
    %v2285 = vmax.f32 %v2277, 0.0
    %v2286 = vpack.c.bf16 %v2279, %v2278
    %v2287 = vpack.c.bf16 %v2281, %v2280
    %v2288 = vpack.c.bf16 %v2283, %v2282
    %v2289 = vpack.c.bf16 %v2285, %v2284
    %v2290 = vld [vmem:[#allocation12] sm:$0xf]
    %v2291 = vld [vmem:[#allocation12 + $0x4] sm:$0xf]
    %v2292 = vld [vmem:[#allocation12 + $0x8] sm:$0xf]
    %v2293 = vld [vmem:[#allocation12 + $0xc] sm:$0xf]
    %v2294 = vld [vmem:[#allocation12 + $0x10] sm:$0xf]
    %v2295 = vld [vmem:[#allocation12 + $0x14] sm:$0xf]
    %v2296 = vld [vmem:[#allocation12 + $0x18] sm:$0xf]
    %v2297 = vld [vmem:[#allocation12 + $0x1c] sm:$0xf]
    %v2298 = vld [vmem:[#allocation12 + $0x20] sm:$0xf]
    %v2299 = vld [vmem:[#allocation12 + $0x24] sm:$0xf]
    %v2300 = vld [vmem:[#allocation12 + $0x28] sm:$0xf]
    %v2301 = vld [vmem:[#allocation12 + $0x2c] sm:$0xf]
    %v2302 = vld [vmem:[#allocation12 + $0x30] sm:$0xf]
    %v2303 = vld [vmem:[#allocation12 + $0x34] sm:$0xf]
    %v2304 = vld [vmem:[#allocation12 + $0x38] sm:$0xf]
    %v2305 = vld [vmem:[#allocation12 + $0x3c] sm:$0xf]
    %v2306 = vld [vmem:[%s9] sm:$0x1]
    %v2308 = vlaneseq
    %v2309 = vshrl.u32 %v2308, 7
    %v2310 = vsub.s32 0, %v2309
    %v2311 = vrot.slane %v2306, %v2310
    %v2329 = vunpack.c.l.b16 %v2290
    %v2330 = vunpack.c.l.b16 %v2291
    %v2331 = vunpack.c.l.b16 %v2292
    %v2332 = vunpack.c.l.b16 %v2293
    %v2333 = vunpack.c.l.b16 %v2294
    %v2334 = vunpack.c.l.b16 %v2295
    %v2335 = vunpack.c.l.b16 %v2296
    %v2336 = vunpack.c.l.b16 %v2297
    %v2337 = vunpack.c.l.b16 %v2298
    %v2338 = vunpack.c.l.b16 %v2299
    %v2339 = vunpack.c.l.b16 %v2300
    %v2340 = vunpack.c.l.b16 %v2301
    %v2341 = vunpack.c.l.b16 %v2302
    %v2342 = vunpack.c.l.b16 %v2303
    %v2343 = vunpack.c.l.b16 %v2304
    %v2344 = vunpack.c.l.b16 %v2305
    %v2345 = vpack.c.b16 %v2330, %v2329
    %v2346 = vpack.c.b16 %v2332, %v2331
    %v2347 = vpack.c.b16 %v2334, %v2333
    %v2348 = vpack.c.b16 %v2336, %v2335
    %v2349 = vpack.c.b16 %v2338, %v2337
    %v2350 = vpack.c.b16 %v2340, %v2339
    %v2351 = vpack.c.b16 %v2342, %v2341
    %v2352 = vpack.c.b16 %v2344, %v2343
    %2361 = vmatprep.subr.bf16.mxu0 0
    %2362 = vmatpush1.bf16.msra.mxu0 %v2345
    %2363 = vmatprep.subr.bf16.mxu0 0
    %2364 = vmatpush1.bf16.msra.mxu0 %v2346
    %2365 = vmatprep.subr.bf16.mxu0 0
    %2366 = vmatpush1.bf16.msra.mxu0 %v2347
    %2367 = vmatprep.subr.bf16.mxu0 0
    %2368 = vmatpush1.bf16.msra.mxu0 %v2348
    %2369 = vmatprep.subr.bf16.mxu0 0
    %2370 = vmatpush1.bf16.msra.mxu0 %v2349
    %2371 = vmatprep.subr.bf16.mxu0 0
    %2372 = vmatpush1.bf16.msra.mxu0 %v2350
    %2373 = vmatprep.subr.bf16.mxu0 0
    %2374 = vmatpush1.bf16.msra.mxu0 %v2351
    %2375 = vmatprep.subr.bf16.mxu0 0
    %2376 = vmatpush1.bf16.msra.mxu0 %v2352
    %2377 = vmatprep.subr.bf16.mxu0 0
    %2378 = vmatpush1.bf16.msra.mxu0 0
    %2379 = vmatprep.subr.bf16.mxu0 0
    %2380 = vmatpush1.bf16.msra.mxu0 0
    %2381 = vmatprep.subr.bf16.mxu0 0
    %2382 = vmatpush1.bf16.msra.mxu0 0
    %2383 = vmatprep.subr.bf16.mxu0 0
    %2384 = vmatpush1.bf16.msra.mxu0 0
    %2385 = vmatprep.subr.bf16.mxu0 0
    %2386 = vmatpush1.bf16.msra.mxu0 0
    %2387 = vmatprep.subr.bf16.mxu0 0
    %2388 = vmatpush1.bf16.msra.mxu0 0
    %2389 = vmatprep.subr.bf16.mxu0 0
    %2390 = vmatpush1.bf16.msra.mxu0 0
    %2391 = vmatprep.subr.bf16.mxu0 0
    %2392 = vmatpush1.bf16.msra.mxu0 0
    %2393 = vmatprep.mubr.bf16.mxu0 0
    %2394 = vmatmul.mubr.bf16.gmra.mrb[0].mxu0 %v2286
    %v2395 = vpop.f32.mrb[0].mxu0
    %v2396 = vadd.f32 %v2311, %v2395
    %v2397 = vpop.f32.mrb[0].mxu0
    %v2398 = vpop.f32.mrb[0].mxu0
    %v2399 = vadd.f32 %v2311, %v2398
    %v2400 = vpop.f32.mrb[0].mxu0
    %2401 = vmatprep.mubr.bf16.mxu0 0
    %2402 = vmatmul.mubr.bf16.gmra.mrb[0].mxu0 %v2287
    %v2403 = vpop.f32.mrb[0].mxu0
    %v2404 = vadd.f32 %v2311, %v2403
    %v2405 = vpop.f32.mrb[0].mxu0
    %v2406 = vpop.f32.mrb[0].mxu0
    %v2407 = vadd.f32 %v2311, %v2406
    %v2408 = vpop.f32.mrb[0].mxu0
    %2409 = vmatprep.mubr.bf16.mxu0 0
    %2410 = vmatmul.mubr.bf16.gmra.mrb[0].mxu0 %v2288
    %v2411 = vpop.f32.mrb[0].mxu0
    %v2412 = vadd.f32 %v2311, %v2411
    %v2413 = vpop.f32.mrb[0].mxu0
    %v2414 = vpop.f32.mrb[0].mxu0
    %v2415 = vadd.f32 %v2311, %v2414
    %v2416 = vpop.f32.mrb[0].mxu0
    %2417 = vmatprep.mubr.bf16.mxu0 0
    %2418 = vmatmul.mubr.bf16.gmra.mrb[0].mxu0 %v2289
    %v2419 = vpop.f32.mrb[0].mxu0
    %v2420 = vadd.f32 %v2311, %v2419
    %v2421 = vpop.f32.mrb[0].mxu0
    %v2422 = vpop.f32.mrb[0].mxu0
    %v2423 = vadd.f32 %v2311, %v2422
    %v2424 = vpop.f32.mrb[0].mxu0
    %2425 = vdwg.mxu0
    %2426 = vst [vmem:[#allocation13] sm:$0xff] %v2396
    %2427 = vst [vmem:[#allocation13 + $0x8] sm:$0xff] %v2399
    %2428 = vst [vmem:[#allocation13 + $0x10] sm:$0xff] %v2404
    %2429 = vst [vmem:[#allocation13 + $0x18] sm:$0xff] %v2407
    %2430 = vst [vmem:[#allocation13 + $0x20] sm:$0xff] %v2412
    %2431 = vst [vmem:[#allocation13 + $0x28] sm:$0xff] %v2415
    %2432 = vst [vmem:[#allocation13 + $0x30] sm:$0xff] %v2420
    %2433 = vst [vmem:[#allocation13 + $0x38] sm:$0xff] %v2423
    // Predicated region
    $region62: #{tpu_custom_call.1} parent=1 // pred_check
      _
    $region63: #{tpu_custom_call.1} parent=1 // pred_check_branch
      %2435 = sbr.rel (0) target = $region65
    $region64: #{tpu_custom_call.1} parent=1 // pred_region
      %s2437 = ssub.s32 1024, 1024
      %2438 = vsyncadd [#allocation6], %s2437
      %s2439 = sshll.u32 [#allocation13], 4
      %s2440 = int_to_ptr.vmem [resolvable:$true] %s2439
      %2445 = dma.vmem_to_hbm [thread:$0]  %s2440, 1024, %s10, [#allocation6], 128, 128, 8
    $region65: #{tpu_custom_call.1} parent=1 // pred_fallthru
      _
    // Predicated region
    $region66: #{tpu_custom_call.1} parent=1 // pred_check
      _
    $region67: #{tpu_custom_call.1} parent=1 // pred_check_branch
      %2447 = sbr.rel (0) target = $region69
    $region68: #{tpu_custom_call.1} parent=1 // pred_region
      %2448 = dma.done [#allocation6], 1024
    $region69: #{tpu_custom_call.1} parent=1 // pred_fallthru
      _
    %2449 = vsyncpa [#allocation5], 1
    %2450 = vsyncpa [#allocation8], 1
    %2451 = vsyncpa [#allocation11], 1
    %2452 = vsyncpa [#allocation6], 1

</llo_original>
